<compile_context>
chip_gen: v7x
topology: tpu7x:2x2x1
jax: 0.10.0
libtpu: 0.0.40
codegen_flags: <defaults>
</compile_context>

<pallas_src>
import jax
import jax.numpy as jnp
from jax.experimental import pallas as pl
from jax.experimental.pallas import tpu as pltpu

W0 = 30.0  # standard SIREN first-layer omega_0


def _round_up(x, m):
    return (x + m - 1) // m * m


def _vmem_capacity_bytes():
    """Physical VMEM of the attached TPU; conservative (v7x-safe) fallback."""
    try:
        cap = getattr(pltpu.get_tpu_info(), "vmem_capacity_bytes", None)
        if cap:
            return int(cap)
    except Exception:
        pass
    return 64 << 20


def make_siren_block(max_num_periods, window_length, T, *, max_rows_per_step=128):
    """Conv1d(1, P, W) + sin(w0 * .) applied to every (bs*ch) row of length T."""
    P = max_num_periods
    W = window_length
    K = W + 1                                   # W conv taps + ones plane (bias)
    L_out = T - W + 1
    assert L_out > 0

    L_pad = _round_up(L_out, 128)               # lane-dense output => unmasked vst
    T_pad = _round_up(L_pad + W - 1, 128)       # every shifted window in-bounds

    # Generation-aware row block: size R so the live VMEM (double-buffered
    # in/out tiles + im2col scratch + matmul/sin temporaries) fits in ~75% of
    # this chip's VMEM (v7x: 64 MiB -> ~48 MiB budget; v5e/v6e: 128 -> ~96 MiB).
    vmem_cap = _vmem_capacity_bytes()
    budget = int(0.75 * vmem_cap)
    bytes_per_row = 4 * (2 * T_pad              # input double buffer
                         + 2 * P * L_pad        # output double buffer
                         + K * L_pad            # im2col scratch
                         + 2 * P * L_pad)       # matmul + sin temporaries
    r_budget = (budget // bytes_per_row) // 8 * 8
    r_budget = max(8, min(int(max_rows_per_step), r_budget))

    def forward(x, weight, bias):
        # x: (bs, ch, T) f32; weight: (P, 1, W); bias: (P,)
        bs, ch, T_in = x.shape
        assert T_in == T
        N = bs * ch

        # Rows per grid step: budget-limited, but no more than half the rows
        # (rounded to full sublanes) so the "parallel" grid has >= 2 steps; pad
        # N to a multiple of 2*R so the grid length is even across 2 TCs (v7x).
        R = max(8, min(r_budget, _round_up(-(-N // 2), 8)))
        N_pad = _round_up(N, 2 * R)

        vmem_req = R * bytes_per_row + 4 * P * K + (64 << 10)
        vmem_limit = int(min(max(int(vmem_req * 1.25), 32 << 20),
                             int(0.9 * vmem_cap)))

        def siren_kernel(x_ref, w_ref, o_ref, cols_ref):
            # x_ref:    (R, T_pad)      zero-padded input rows
            # w_ref:    (P, K)          [w0*W | w0*b]  (w0 and bias pre-folded)
            # o_ref:    (R, P, L_pad)   sin(w0 * (conv1d(x) + b))
            # cols_ref: (R, K, L_pad)   im2col scratch (last plane = ones)
            for k in range(W):                              # W small: static unroll
                cols_ref[:, k, :] = x_ref[:, k:k + L_pad]   # cols[r,k,l] = x[r, l+k]
            # Ones plane carries the bias through the MXU contraction.  Written
            # every step (megacore-safe; costs only 1/K of the scratch stores).
            cols_ref[:, W, :] = jnp.ones((R, L_pad), jnp.float32)
            cols = cols_ref[...]
            w_b = jnp.broadcast_to(w_ref[...], (R, P, K))   # tiny, once per step
            # Batched MXU matmul: contract over k, batch over rows -> (R, P, L_pad).
            y = jnp.einsum("rpk,rkl->rpl", w_b, cols,
                           preferred_element_type=jnp.float32)
            o_ref[...] = jnp.sin(y)                         # w0/bias already folded in

        # Glue reshape/pad (the .view(-1, 1, T) of the PyTorch module + padding).
        x_rows = x.reshape(N, T).astype(jnp.float32)
        x_rows = jnp.pad(x_rows, ((0, N_pad - N), (0, T_pad - T)))

        # Fold w0 and the bias into the weight matrix:
        #   sin(w0*(W@x + b)) == sin([w0*W | w0*b] @ [x ; 1]).
        w2 = jnp.concatenate(
            [weight.reshape(P, W) * W0, bias.reshape(P, 1) * W0],
            axis=1).astype(jnp.float32)                     # (P, K)

        out = pl.pallas_call(
            siren_kernel,
            out_shape=jax.ShapeDtypeStruct((N_pad, P, L_pad), jnp.float32),
            grid_spec=pltpu.PrefetchScalarGridSpec(
                num_scalar_prefetch=0,
                grid=(N_pad // R,),
                in_specs=[
                    pl.BlockSpec((R, T_pad), lambda n: (n, 0)),
                    pl.BlockSpec((P, K), lambda n: (0, 0)),
                ],
                out_specs=pl.BlockSpec((R, P, L_pad), lambda n: (n, 0, 0)),
                scratch_shapes=[pltpu.VMEM((R, K, L_pad), jnp.float32)],
            ),
            compiler_params=pltpu.CompilerParams(
                dimension_semantics=("parallel",),
                vmem_limit_bytes=vmem_limit),
        )(x_rows, w2)

        # Crop row/lane padding and restore (bs, ch, P, L_out) (the final .view).
        return out[:N, :, :L_out].reshape(bs, ch, P, L_out)

    return forward, (P, W, L_out)


def init_params(key, max_num_periods, window_length):
    # SIREN first-layer init: U(-1/fan_in, 1/fan_in), fan_in = in_ch * kernel = W
    kw, kb = jax.random.split(key)
    fan_in = 1 * window_length
    bound = 1.0 / fan_in
    weight = jax.random.uniform(kw, (max_num_periods, 1, window_length),
                                jnp.float32, minval=-bound, maxval=bound)
    bias = jax.random.uniform(kb, (max_num_periods,), jnp.float32,
                              minval=-bound, maxval=bound)
    return weight, bias


def reference_forward(x, weight, bias, max_num_periods, window_length):
    # Pure-JAX reference: Conv1d(1, P, W) + sin(w0 * .), w0 NOT folded.
    bs, ch, T = x.shape
    P, _, W = weight.shape
    L_out = T - W + 1
    x_rows = x.reshape(bs * ch, T)
    cols = jnp.stack([x_rows[:, k:k + L_out] for k in range(W)], axis=1)  # (N, W, L_out)
    y = jnp.einsum('pw,nwl->npl', weight.reshape(P, W), cols) + bias[None, :, None]
    return jnp.sin(W0 * y).reshape(bs, ch, P, L_out)


if __name__ == "__main__":
    bs, ch, T = 2, 4, 16
    max_num_periods, window_length = 8, 4

    key = jax.random.PRNGKey(0)
    kx, kp = jax.random.split(key)
    x = jax.random.normal(kx, (bs, ch, T), dtype=jnp.float32)
    weight, bias = init_params(kp, max_num_periods, window_length)

    forward, (P, W, L_out) = make_siren_block(max_num_periods, window_length, T)
    out = forward(x, weight, bias)
    out = jax.block_until_ready(out)

    ref = reference_forward(x, weight, bias, max_num_periods, window_length)
    assert out.shape == (bs, ch, max_num_periods, L_out), out.shape
    assert jnp.allclose(out, ref, atol=1e-4, rtol=1e-5), \
        float(jnp.max(jnp.abs(out - ref)))

    print("KERNEL_OK")
</pallas_src>

<mosaic_0001>
module attributes {stable_mosaic.version = 11 : i64} {
  func.func @siren_kernel(%arg0: i32, %arg1: memref<8x256xf32, #tpu.memory_space<vmem>>, %arg2: memref<8x5xf32, #tpu.memory_space<vmem>>, %arg3: memref<8x8x128xf32, #tpu.memory_space<vmem>>, %arg4: memref<8x5x128xf32, #tpu.memory_space<vmem>>) attributes {dimension_semantics = [#tpu.dimension_semantics<parallel>], iteration_bounds = array<i64: 2>, scalar_prefetch = 0 : i64, scratch_operands = 1 : i64, tpu.core_type = #tpu.core_type<tc>, window_params = [{transform_indices = @transform_0, window_bounds = array<i64: 8, 256>}, {pipeline_mode = #tpu.pipeline_mode<synchronous>, transform_indices = @transform_1, window_bounds = array<i64: 8, 5>}, {transform_indices = @transform_2, window_bounds = array<i64: 8, 8, 128>}]} {
    %c0 = arith.constant 0 : index
    %c0_0 = arith.constant 0 : index
    %0 = vector.load %arg1[%c0, %c0_0] : memref<8x256xf32, #tpu.memory_space<vmem>>, vector<8x128xf32>
    %c0_1 = arith.constant 0 : index
    %c0_2 = arith.constant 0 : index
    %c0_3 = arith.constant 0 : index
    %1 = vector.load %arg4[%c0_1, %c0_2, %c0_3] : memref<8x5x128xf32, #tpu.memory_space<vmem>>, vector<8x1x128xf32>
    %2 = vector.shape_cast %1 : vector<8x1x128xf32> to vector<8x128xf32>
    %3 = vector.shape_cast %0 : vector<8x128xf32> to vector<8x1x128xf32>
    tpu.vector_store %arg4[%c0_1, %c0_2, %c0_3], %3 {strides = array<i32>} : memref<8x5x128xf32, #tpu.memory_space<vmem>>, vector<8x1x128xf32>,
    %c0_4 = arith.constant 0 : index
    %c1 = arith.constant 1 : index
    %4 = vector.load %arg1[%c0_4, %c1] : memref<8x256xf32, #tpu.memory_space<vmem>>, vector<8x128xf32>
    %c0_5 = arith.constant 0 : index
    %c1_6 = arith.constant 1 : index
    %c0_7 = arith.constant 0 : index
    %5 = vector.load %arg4[%c0_5, %c1_6, %c0_7] : memref<8x5x128xf32, #tpu.memory_space<vmem>>, vector<8x1x128xf32>
    %6 = vector.shape_cast %5 : vector<8x1x128xf32> to vector<8x128xf32>
    %7 = vector.shape_cast %4 : vector<8x128xf32> to vector<8x1x128xf32>
    tpu.vector_store %arg4[%c0_5, %c1_6, %c0_7], %7 {strides = array<i32>} : memref<8x5x128xf32, #tpu.memory_space<vmem>>, vector<8x1x128xf32>,
    %c0_8 = arith.constant 0 : index
    %c2 = arith.constant 2 : index
    %8 = vector.load %arg1[%c0_8, %c2] : memref<8x256xf32, #tpu.memory_space<vmem>>, vector<8x128xf32>
    %c0_9 = arith.constant 0 : index
    %c2_10 = arith.constant 2 : index
    %c0_11 = arith.constant 0 : index
    %9 = vector.load %arg4[%c0_9, %c2_10, %c0_11] : memref<8x5x128xf32, #tpu.memory_space<vmem>>, vector<8x1x128xf32>
    %10 = vector.shape_cast %9 : vector<8x1x128xf32> to vector<8x128xf32>
    %11 = vector.shape_cast %8 : vector<8x128xf32> to vector<8x1x128xf32>
    tpu.vector_store %arg4[%c0_9, %c2_10, %c0_11], %11 {strides = array<i32>} : memref<8x5x128xf32, #tpu.memory_space<vmem>>, vector<8x1x128xf32>,
    %c0_12 = arith.constant 0 : index
    %c3 = arith.constant 3 : index
    %12 = vector.load %arg1[%c0_12, %c3] : memref<8x256xf32, #tpu.memory_space<vmem>>, vector<8x128xf32>
    %c0_13 = arith.constant 0 : index
    %c3_14 = arith.constant 3 : index
    %c0_15 = arith.constant 0 : index
    %13 = vector.load %arg4[%c0_13, %c3_14, %c0_15] : memref<8x5x128xf32, #tpu.memory_space<vmem>>, vector<8x1x128xf32>
    %14 = vector.shape_cast %13 : vector<8x1x128xf32> to vector<8x128xf32>
    %15 = vector.shape_cast %12 : vector<8x128xf32> to vector<8x1x128xf32>
    tpu.vector_store %arg4[%c0_13, %c3_14, %c0_15], %15 {strides = array<i32>} : memref<8x5x128xf32, #tpu.memory_space<vmem>>, vector<8x1x128xf32>,
    %cst = arith.constant 1.000000e+00 : f32
    %16 = vector.broadcast %cst : f32 to vector<8x128xf32>
    %c0_16 = arith.constant 0 : index
    %c4 = arith.constant 4 : index
    %c0_17 = arith.constant 0 : index
    %17 = vector.load %arg4[%c0_16, %c4, %c0_17] : memref<8x5x128xf32, #tpu.memory_space<vmem>>, vector<8x1x128xf32>
    %18 = vector.shape_cast %17 : vector<8x1x128xf32> to vector<8x128xf32>
    %19 = vector.shape_cast %16 : vector<8x128xf32> to vector<8x1x128xf32>
    tpu.vector_store %arg4[%c0_16, %c4, %c0_17], %19 {strides = array<i32>} : memref<8x5x128xf32, #tpu.memory_space<vmem>>, vector<8x1x128xf32>,
    %c0_18 = arith.constant 0 : index
    %c0_19 = arith.constant 0 : index
    %c0_20 = arith.constant 0 : index
    %20 = vector.load %arg4[%c0_18, %c0_19, %c0_20] : memref<8x5x128xf32, #tpu.memory_space<vmem>>, vector<8x5x128xf32>
    %c0_21 = arith.constant 0 : index
    %c0_22 = arith.constant 0 : index
    %21 = vector.load %arg2[%c0_21, %c0_22] : memref<8x5xf32, #tpu.memory_space<vmem>>, vector<8x5xf32>
    %22 = vector.shape_cast %21 : vector<8x5xf32> to vector<1x8x5xf32>
    %23 = vector.broadcast %22 : vector<1x8x5xf32> to vector<8x8x5xf32>
    "tpu.trace_start"() <{level = 10 : i32, message = "rpk,rkl->rpl"}> : () -> ()
    %cst_23 = arith.constant dense<0.000000e+00> : vector<8x8x128xf32>
    %24 = tpu.matmul %23, %20, %cst_23 {dimension_numbers = #tpu.dot_dimension_numbers<[2], [1], [1], [2], [0, 0, 0, 1, 1, 2], [0], [0]>} : vector<8x8x5xf32>, vector<8x5x128xf32>, vector<8x8x128xf32> -> vector<8x8x128xf32>
    "tpu.trace_stop"() : () -> ()
    %25 = math.sin %24 : vector<8x8x128xf32>
    %c0_24 = arith.constant 0 : index
    %c0_25 = arith.constant 0 : index
    %c0_26 = arith.constant 0 : index
    %26 = vector.load %arg3[%c0_24, %c0_25, %c0_26] : memref<8x8x128xf32, #tpu.memory_space<vmem>>, vector<8x8x128xf32>
    tpu.vector_store %arg3[%c0_24, %c0_25, %c0_26], %25 {strides = array<i32>} : memref<8x8x128xf32, #tpu.memory_space<vmem>>, vector<8x8x128xf32>,
    return
  }
  func.func @transform_0(%arg0: i32) -> (i32, i32) {
    %c0_i32 = arith.constant 0 : i32
    %c0_i32_0 = arith.constant 0 : i32
    return %arg0, %c0_i32 : i32, i32
  }
  func.func @transform_1(%arg0: i32) -> (i32, i32) {
    %c0_i32 = arith.constant 0 : i32
    %c0_i32_0 = arith.constant 0 : i32
    %c0_i32_1 = arith.constant 0 : i32
    return %c0_i32, %c0_i32_0 : i32, i32
  }
  func.func @transform_2(%arg0: i32) -> (i32, i32, i32) {
    %c0_i32 = arith.constant 0 : i32
    %c0_i32_0 = arith.constant 0 : i32
    %c0_i32_1 = arith.constant 0 : i32
    return %arg0, %c0_i32, %c0_i32_0 : i32, i32, i32
  }
}

</mosaic_0001>

<llo_original>
// kernel: tpu_custom_call.1
$region0: #{tpu_custom_call.1}
  #allocation0 [shape = 'u32[]', space=smem, size = 0x4, offset = 0x4, fixed_abs, tag = 'smem constant byte address 0x4 - core index']
  #allocation1 [shape = 'u32[144,128]{1,0:T(1,128)}', space=vmem, size = 0x12000, scoped, tag = 'internal scratch']
  #allocation2 [shape = 'f32[8,5,128]{2,1,0:T(8,128)}', space=vmem, size = 0x8000, scoped, tag = 'scratch operand']
  %s0 = inlined_call_operand.hbm [shape: f32[16,256], index: 0, kind: input, shape index: {}]
  %s1 = inlined_call_operand.hbm [shape: f32[8,5], index: 1, kind: input, shape index: {}]
  %s2 = inlined_call_operand.hbm [shape: f32[16,8,128], index: 2, kind: output, shape index: {}]
  %s3 = sld [smem:[#allocation0]]
  $region49: #{tpu_custom_call.1} parent=0
    _
  %s5 = ssub.s32 1, %s3
  %s6 = scalar_select 0, %s5, %s3
  $region1: #{tpu_custom_call.1} parent=0
    #allocation3 [shape = 'u8[16384]{0}', space=vmem, size = 0x4000, scoped, tag = 'input window, operand 0']
    #allocation4 [shape = 's32[2]{0}', space=sflag, size = 0x8, scoped, tag = 'scoped memory for tpu_custom_call.1']
    #allocation5 [shape = 's32[2]{0}', space=sflag, size = 0x8, scoped, tag = 'scoped memory for tpu_custom_call.1']
    #allocation6 [shape = 'u8[4096]{0}', space=vmem, size = 0x1000, scoped, tag = 'input window, operand 1, single buffered']
    #allocation7 [shape = 's32[1]{0}', space=sflag, size = 0x4, scoped, tag = 'scoped memory for tpu_custom_call.1']
    #allocation8 [shape = 'u8[65536]{0}', space=vmem, size = 0x10000, scoped, tag = 'output window, operand 0']
    %7 = vsyncpa [#allocation4], 0
    %s8 = scalar_lea.sflag [#allocation4], 1
    %9 = vsyncpa %s8, 0
    %10 = vsyncpa [#allocation7], 0
    %11 = vsyncpa [#allocation5], 0
    %s12 = scalar_lea.sflag [#allocation5], 1
    %13 = vsyncpa %s12, 0
    loop: start=0, step=1, limit=4
    $region2: #{tpu_custom_call.1} parent=1 // loop_pre_header
      _
    $region3: #{tpu_custom_call.1} parent=1 // loop_header
      %s15 = sphi 0, %s19
      %p16 = scmp.ge.s32.totalorder %s15, 4
      %s25 = sphi 0, %s27
      %s28 = sphi 0, %s25
      %s29 = sphi 0, %s28
      %s45 = sphi 0, %s29
      %s49 = sphi 0, %s49
      %s51 = sphi 0, %s49
      %s52 = sphi 0, %s51
      %s66 = sphi 0, %s52
      %s72 = sphi 0, %s74
      %s75 = sphi 0, %s72
      %s76 = sphi 0, %s75
      %s92 = sphi 0, %s76
    $region4: #{tpu_custom_call.1} parent=1 // loop_header_branch
      %18 = sbr.rel (%p16) target = $region8
    $region5: #{tpu_custom_call.1} parent=1 // loop_body
      %s20 = ssub.s32 %s15, 1
      %s21 = ssub.s32 %s15, 2
      %s22 = sadd.s32 %s15, 1
      %s23 = ssub.s32 %s15, %s22
      %p24 = scmp.eq.s32.totalorder %s23, 0
      %s26 = sadd.s32 %s25, 1
      %s27 = scalar_select %p24, %s25, %s26
      %p30 = pneg %p24
      %p31 = scmp.eq.s32.totalorder %s15, 1
      %p32 = por %p30, %p31
      %p33 = scmp.ne.s32.totalorder %s25, %s28
      %p34 = scmp.eq.s32.totalorder %s15, 0
      %p35 = por %p33, %p34
      %p36 = scmp.ne.s32.totalorder %s25, %s28
      %p37 = scmp.eq.s32.totalorder %s20, 1
      %p38 = por %p36, %p37
      %p39 = scmp.ne.s32.totalorder %s28, %s29
      %p40 = scmp.eq.s32.totalorder %s20, 0
      %p41 = por %p39, %p40
      %p42 = scmp.ne.s32.totalorder %s28, %s29
      %p43 = scmp.eq.s32.totalorder %s21, 1
      %p44 = por %p42, %p43
      %p46 = scmp.ne.s32.totalorder %s29, %s45
      %p47 = scmp.eq.s32.totalorder %s21, 0
      %p48 = por %p46, %p47
      %s50 = sadd.s32 %s49, 1
      %p53 = scmp.eq.s32.totalorder %s15, 1
      %p54 = scmp.ne.s32.totalorder %s49, %s51
      %p55 = scmp.eq.s32.totalorder %s15, 0
      %p56 = por %p54, %p55
      %p57 = scmp.ne.s32.totalorder %s49, %s51
      %p58 = scmp.eq.s32.totalorder %s20, 1
      %p59 = por %p57, %p58
      %p60 = scmp.ne.s32.totalorder %s51, %s52
      %p61 = scmp.eq.s32.totalorder %s20, 0
      %p62 = por %p60, %p61
      %p63 = scmp.ne.s32.totalorder %s51, %s52
      %p64 = scmp.eq.s32.totalorder %s21, 1
      %p65 = por %p63, %p64
      %p67 = scmp.ne.s32.totalorder %s52, %s66
      %p68 = scmp.eq.s32.totalorder %s21, 0
      %p69 = por %p67, %p68
      %s70 = ssub.s32 %s15, %s22
      %p71 = scmp.eq.s32.totalorder %s70, 0
      %s73 = sadd.s32 %s72, 1
      %s74 = scalar_select %p71, %s72, %s73
      %p77 = pneg %p71
      %p78 = scmp.eq.s32.totalorder %s15, 1
      %p79 = por %p77, %p78
      %p80 = scmp.ne.s32.totalorder %s72, %s75
      %p81 = scmp.eq.s32.totalorder %s15, 0
      %p82 = por %p80, %p81
      %p83 = scmp.ne.s32.totalorder %s72, %s75
      %p84 = scmp.eq.s32.totalorder %s20, 1
      %p85 = por %p83, %p84
      %p86 = scmp.ne.s32.totalorder %s75, %s76
      %p87 = scmp.eq.s32.totalorder %s20, 0
      %p88 = por %p86, %p87
      %p89 = scmp.ne.s32.totalorder %s75, %s76
      %p90 = scmp.eq.s32.totalorder %s21, 1
      %p91 = por %p89, %p90
      %p93 = scmp.ne.s32.totalorder %s76, %s92
      %p94 = scmp.eq.s32.totalorder %s21, 0
      %p95 = por %p93, %p94
      %p96 = scmp.le.s32.totalorder 1, %s15
      %p97 = scmp.lt.s32.totalorder %s15, 3
      %p98 = pnand %p96, %p97
      %p99 = pneg %p98
      // Predicated region
      $region9: #{tpu_custom_call.1} parent=5 // pred_check
        _
      $region10: #{tpu_custom_call.1} parent=5 // pred_check_branch
        %101 = sbr.rel (%p98) target = $region12
      $region11: #{tpu_custom_call.1} parent=5 // pred_region
        %s102 = ssub.s32 %s15, 1
        // Predicated region
        $region13: #{tpu_custom_call.1} parent=11 // pred_check
          %p103 = pneg %p62
        $region14: #{tpu_custom_call.1} parent=11 // pred_check_branch
          %105 = sbr.rel (%p103) target = $region16
        $region15: #{tpu_custom_call.1} parent=11 // pred_region
          %s107 = ssub.s32 128, 128
          %108 = vsyncadd [#allocation7], %s107
          %s110 = sshll.u32 [#allocation6], 4
          %s111 = int_to_ptr.vmem [resolvable:$true] %s110
          %113 = dma.hbm_to_vmem [thread:$0]  %s1, 128, %s111, [#allocation7]
        $region16: #{tpu_custom_call.1} parent=11 // pred_fallthru
          _
      $region12: #{tpu_custom_call.1} parent=5 // pred_fallthru
        _
      %p114 = scmp.lt.s32.totalorder %s15, 2
      // Predicated region
      $region17: #{tpu_custom_call.1} parent=5 // pred_check
        %p115 = pneg %p114
      $region18: #{tpu_custom_call.1} parent=5 // pred_check_branch
        %117 = sbr.rel (%p115) target = $region20
      $region19: #{tpu_custom_call.1} parent=5 // pred_region
        // Predicated region
        $region21: #{tpu_custom_call.1} parent=19 // pred_check
          %p118 = pneg %p35
        $region22: #{tpu_custom_call.1} parent=19 // pred_check_branch
          %120 = sbr.rel (%p118) target = $region24
        $region23: #{tpu_custom_call.1} parent=19 // pred_region
          %s121 = sand.u32 %s25, 1
          %s122 = scalar_lea.sflag [#allocation4], %s121
          %s123 = sand.u32 %s25, 1
          %s124 = smul.addr %s123, 16
          %s125 = scalar_lea.vmem [#allocation3], %s124
          %s127 = ssub.s32 256, 256
          %128 = vsyncadd %s122, %s127
          %s129 = smul.addr %s15, 2
          %s130 = smul.addr %s129, 128
          %s131 = scalar_lea.hbm %s0, %s130
          %s133 = sshll.u32 %s125, 4
          %s134 = int_to_ptr.vmem [resolvable:$true] %s133
          %136 = dma.hbm_to_vmem [thread:$0]  %s131, 256, %s134, %s122
        $region24: #{tpu_custom_call.1} parent=19 // pred_fallthru
          _
      $region20: #{tpu_custom_call.1} parent=5 // pred_fallthru
        _
      %p137 = scmp.le.s32.totalorder 1, %s15
      %p138 = scmp.lt.s32.totalorder %s15, 3
      %p139 = pnand %p137, %p138
      %p140 = pneg %p139
      // Predicated region
      $region25: #{tpu_custom_call.1} parent=5 // pred_check
        _
      $region26: #{tpu_custom_call.1} parent=5 // pred_check_branch
        %142 = sbr.rel (%p139) target = $region28
      $region27: #{tpu_custom_call.1} parent=5 // pred_region
        %s143 = ssub.s32 %s15, 1
        %s144 = sand.u32 %s28, 1
        %s145 = scalar_lea.sflag [#allocation4], %s144
        %s146 = sand.u32 %s28, 1
        %s147 = smul.addr %s146, 16
        %s148 = scalar_lea.vmem [#allocation3], %s147
        // Predicated region
        $region29: #{tpu_custom_call.1} parent=27 // pred_check
          %p149 = pneg %p41
        $region30: #{tpu_custom_call.1} parent=27 // pred_check_branch
          %151 = sbr.rel (%p149) target = $region32
        $region31: #{tpu_custom_call.1} parent=27 // pred_region
          %152 = dma.done %s145, 256
        $region32: #{tpu_custom_call.1} parent=27 // pred_fallthru
          _
        // Predicated region
        $region33: #{tpu_custom_call.1} parent=27 // pred_check
          %p153 = pneg %p62
        $region34: #{tpu_custom_call.1} parent=27 // pred_check_branch
          %155 = sbr.rel (%p153) target = $region36
        $region35: #{tpu_custom_call.1} parent=27 // pred_region
          %156 = dma.done [#allocation7], 128
        $region36: #{tpu_custom_call.1} parent=27 // pred_fallthru
          _
        %s157 = sand.u32 %s28, 1
        %s158 = scalar_lea.sflag [#allocation4], %s157
        %s159 = sand.u32 %s28, 1
        %s160 = smul.addr %s159, 16
        %s161 = scalar_lea.vmem [#allocation3], %s160
        %p162 = pneg %p41
        %p163 = pneg %p38
        %p164 = pneg %p62
        %p165 = pneg %p59
        %p166 = pneg %p88
        %p167 = pneg %p85
        %s168 = sand.u32 %s75, 1
        %s169 = scalar_lea.sflag [#allocation5], %s168
        %s170 = sand.u32 %s75, 1
        %s171 = smul.addr %s170, 64
        %s172 = scalar_lea.vmem [#allocation8], %s171
        %s173 = smul.u32 8, %s20
        %v174 = vld [vmem:[%s148] sm:$0xff]
        %v176 = vcombine.high %v174, %v174
        %v178 = vunpack.c.l.s4 1966171168
        %v179 = vunpack.c.0.s8 %v178
        %v180 = vlaneseq
        %v181 = vshrl.u32 %v180, 7
        %v182 = vsub.s32 %v179, %v181
        %v183 = vrot.slane %v174, %v182
        %v185 = vunpack.c.l.s4 1966171168
        %v186 = vunpack.c.0.s8 %v185
        %v187 = vlaneseq
        %v188 = vshrl.u32 %v187, 7
        %v189 = vsub.s32 %v186, %v188
        %v190 = vrot.slane %v176, %v189
        %v191 = vcombine.high %v183, %v183
        %v192 = vcombine.high %v190, %v190
        %v194 = vunpack.c.l.s4 1966171168
        %v195 = vunpack.c.0.s8 %v194
        %v196 = vlaneseq
        %v197 = vshrl.u32 %v196, 7
        %v198 = vsub.s32 %v195, %v197
        %v199 = vrot.slane %v183, %v198
        %v201 = vunpack.c.l.s4 1966171168
        %v202 = vunpack.c.0.s8 %v201
        %v203 = vlaneseq
        %v204 = vshrl.u32 %v203, 7
        %v205 = vsub.s32 %v202, %v204
        %v206 = vrot.slane %v190, %v205
        %v208 = vunpack.c.l.s4 1966171168
        %v209 = vunpack.c.0.s8 %v208
        %v210 = vlaneseq
        %v211 = vshrl.u32 %v210, 7
        %v212 = vsub.s32 %v209, %v211
        %v213 = vrot.slane %v191, %v212
        %v215 = vunpack.c.l.s4 1966171168
        %v216 = vunpack.c.0.s8 %v215
        %v217 = vlaneseq
        %v218 = vshrl.u32 %v217, 7
        %v219 = vsub.s32 %v216, %v218
        %v220 = vrot.slane %v192, %v219
        %v221 = vcombine.high %v199, %v199
        %v222 = vcombine.high %v206, %v206
        %v223 = vcombine.high %v213, %v213
        %v224 = vcombine.high %v220, %v220
        %233 = vst [vmem:[#allocation2] sm:$0x1] %v199
        %234 = vst [vmem:[#allocation2 + $0x8] sm:$0x1] %v213
        %235 = vst [vmem:[#allocation2 + $0x10] sm:$0x1] %v221
        %236 = vst [vmem:[#allocation2 + $0x18] sm:$0x1] %v223
        %237 = vst [vmem:[#allocation2 + $0x20] sm:$0x1] %v206
        %238 = vst [vmem:[#allocation2 + $0x28] sm:$0x1] %v220
        %239 = vst [vmem:[#allocation2 + $0x30] sm:$0x1] %v222
        %240 = vst [vmem:[#allocation2 + $0x38] sm:$0x1] %v224
        %v241 = vld [vmem:[%s148] sm:$0xff]
        %v242 = vld [vmem:[%s148 + $0x8] sm:$0xff]
        %v245 = vcombine.low %v241, %v242
        %v246 = vcombine.high %v241, %v242
        %v248 = vunpack.c.l.s4 1966171168
        %v249 = vunpack.c.0.s8 %v248
        %v250 = vlaneseq
        %v251 = vshrl.u32 %v250, 7
        %v252 = vsub.s32 %v249, %v251
        %v253 = vrot.slane %v245, %v252
        %v255 = vunpack.c.l.s4 1966171168
        %v256 = vunpack.c.0.s8 %v255
        %v257 = vlaneseq
        %v258 = vshrl.u32 %v257, 7
        %v259 = vsub.s32 %v256, %v258
        %v260 = vrot.slane %v246, %v259
        %v261 = vcombine.high %v253, %v253
        %v262 = vcombine.high %v260, %v260
        %v264 = vunpack.c.l.s4 1966171168
        %v265 = vunpack.c.0.s8 %v264
        %v266 = vlaneseq
        %v267 = vshrl.u32 %v266, 7
        %v268 = vsub.s32 %v265, %v267
        %v269 = vrot.slane %v253, %v268
        %v271 = vunpack.c.l.s4 1966171168
        %v272 = vunpack.c.0.s8 %v271
        %v273 = vlaneseq
        %v274 = vshrl.u32 %v273, 7
        %v275 = vsub.s32 %v272, %v274
        %v276 = vrot.slane %v260, %v275
        %v278 = vunpack.c.l.s4 1966171168
        %v279 = vunpack.c.0.s8 %v278
        %v280 = vlaneseq
        %v281 = vshrl.u32 %v280, 7
        %v282 = vsub.s32 %v279, %v281
        %v283 = vrot.slane %v261, %v282
        %v285 = vunpack.c.l.s4 1966171168
        %v286 = vunpack.c.0.s8 %v285
        %v287 = vlaneseq
        %v288 = vshrl.u32 %v287, 7
        %v289 = vsub.s32 %v286, %v288
        %v290 = vrot.slane %v262, %v289
        %v291 = vcombine.high %v269, %v269
        %v292 = vcombine.high %v276, %v276
        %v293 = vcombine.high %v283, %v283
        %v294 = vcombine.high %v290, %v290
        %v295 = vlaneseq
        %v296 = vshrl.u32 %v295, 7
        %v297 = vsub.s32 0, %v296
        %v298 = vrot.slane %v269, %v297
        %v299 = vlaneseq
        %v300 = vshrl.u32 %v299, 7
        %v301 = vsub.s32 1, %v300
        %v302 = vrot.slane %v269, %v301
        %v303 = vlaneseq
        %v304 = vshrl.u32 %v303, 7
        %v305 = vsub.s32 0, %v304
        %v306 = vrot.slane %v283, %v305
        %v307 = vlaneseq
        %v308 = vshrl.u32 %v307, 7
        %v309 = vsub.s32 1, %v308
        %v310 = vrot.slane %v283, %v309
        %v311 = vlaneseq
        %v312 = vshrl.u32 %v311, 7
        %v313 = vsub.s32 0, %v312
        %v314 = vrot.slane %v291, %v313
        %v315 = vlaneseq
        %v316 = vshrl.u32 %v315, 7
        %v317 = vsub.s32 1, %v316
        %v318 = vrot.slane %v291, %v317
        %v319 = vlaneseq
        %v320 = vshrl.u32 %v319, 7
        %v321 = vsub.s32 0, %v320
        %v322 = vrot.slane %v293, %v321
        %v323 = vlaneseq
        %v324 = vshrl.u32 %v323, 7
        %v325 = vsub.s32 1, %v324
        %v326 = vrot.slane %v293, %v325
        %v327 = vlaneseq
        %v328 = vshrl.u32 %v327, 7
        %v329 = vsub.s32 0, %v328
        %v330 = vrot.slane %v276, %v329
        %v331 = vlaneseq
        %v332 = vshrl.u32 %v331, 7
        %v333 = vsub.s32 1, %v332
        %v334 = vrot.slane %v276, %v333
        %v335 = vlaneseq
        %v336 = vshrl.u32 %v335, 7
        %v337 = vsub.s32 0, %v336
        %v338 = vrot.slane %v290, %v337
        %v339 = vlaneseq
        %v340 = vshrl.u32 %v339, 7
        %v341 = vsub.s32 1, %v340
        %v342 = vrot.slane %v290, %v341
        %v343 = vlaneseq
        %v344 = vshrl.u32 %v343, 7
        %v345 = vsub.s32 0, %v344
        %v346 = vrot.slane %v292, %v345
        %v347 = vlaneseq
        %v348 = vshrl.u32 %v347, 7
        %v349 = vsub.s32 1, %v348
        %v350 = vrot.slane %v292, %v349
        %v351 = vlaneseq
        %v352 = vshrl.u32 %v351, 7
        %v353 = vsub.s32 0, %v352
        %v354 = vrot.slane %v294, %v353
        %v355 = vlaneseq
        %v356 = vshrl.u32 %v355, 7
        %v357 = vsub.s32 1, %v356
        %v358 = vrot.slane %v294, %v357
        %359 = vrot.lane.b32.xlu0 %v298, 127
        %v360 = vpop.permute.xlu0 %359
        %361 = vrot.lane.b32.xlu0 %v302, 127
        %v362 = vpop.permute.xlu0 %361
        %363 = vrot.lane.b32.xlu0 %v306, 127
        %v364 = vpop.permute.xlu0 %363
        %365 = vrot.lane.b32.xlu0 %v310, 127
        %v366 = vpop.permute.xlu0 %365
        %367 = vrot.lane.b32.xlu0 %v314, 127
        %v368 = vpop.permute.xlu0 %367
        %369 = vrot.lane.b32.xlu0 %v318, 127
        %v370 = vpop.permute.xlu0 %369
        %371 = vrot.lane.b32.xlu0 %v322, 127
        %v372 = vpop.permute.xlu0 %371
        %373 = vrot.lane.b32.xlu0 %v326, 127
        %v374 = vpop.permute.xlu0 %373
        %375 = vrot.lane.b32.xlu0 %v330, 127
        %v376 = vpop.permute.xlu0 %375
        %377 = vrot.lane.b32.xlu0 %v334, 127
        %v378 = vpop.permute.xlu0 %377
        %379 = vrot.lane.b32.xlu0 %v338, 127
        %v380 = vpop.permute.xlu0 %379
        %381 = vrot.lane.b32.xlu0 %v342, 127
        %v382 = vpop.permute.xlu0 %381
        %383 = vrot.lane.b32.xlu0 %v346, 127
        %v384 = vpop.permute.xlu0 %383
        %385 = vrot.lane.b32.xlu0 %v350, 127
        %v386 = vpop.permute.xlu0 %385
        %387 = vrot.lane.b32.xlu0 %v354, 127
        %v388 = vpop.permute.xlu0 %387
        %389 = vrot.lane.b32.xlu0 %v358, 127
        %v390 = vpop.permute.xlu0 %389
        %vm391 = vcmask 1039360
        %v392 = vsel %vm391, %v360, %v362
        %v393 = vsel %vm391, %v364, %v366
        %v394 = vsel %vm391, %v368, %v370
        %v395 = vsel %vm391, %v372, %v374
        %v396 = vsel %vm391, %v376, %v378
        %v397 = vsel %vm391, %v380, %v382
        %v398 = vsel %vm391, %v384, %v386
        %v399 = vsel %vm391, %v388, %v390
        %408 = vst [vmem:[#allocation2 + $0x1] sm:$0x1] %v392
        %409 = vst [vmem:[#allocation2 + $0x9] sm:$0x1] %v393
        %410 = vst [vmem:[#allocation2 + $0x11] sm:$0x1] %v394
        %411 = vst [vmem:[#allocation2 + $0x19] sm:$0x1] %v395
        %412 = vst [vmem:[#allocation2 + $0x21] sm:$0x1] %v396
        %413 = vst [vmem:[#allocation2 + $0x29] sm:$0x1] %v397
        %414 = vst [vmem:[#allocation2 + $0x31] sm:$0x1] %v398
        %415 = vst [vmem:[#allocation2 + $0x39] sm:$0x1] %v399
        %v416 = vld [vmem:[%s148] sm:$0xff]
        %v417 = vld [vmem:[%s148 + $0x8] sm:$0xff]
        %v420 = vcombine.low %v416, %v417
        %v421 = vcombine.high %v416, %v417
        %v423 = vunpack.c.l.s4 1966171168
        %v424 = vunpack.c.0.s8 %v423
        %v425 = vlaneseq
        %v426 = vshrl.u32 %v425, 7
        %v427 = vsub.s32 %v424, %v426
        %v428 = vrot.slane %v420, %v427
        %v430 = vunpack.c.l.s4 1966171168
        %v431 = vunpack.c.0.s8 %v430
        %v432 = vlaneseq
        %v433 = vshrl.u32 %v432, 7
        %v434 = vsub.s32 %v431, %v433
        %v435 = vrot.slane %v421, %v434
        %v436 = vcombine.high %v428, %v428
        %v437 = vcombine.high %v435, %v435
        %v439 = vunpack.c.l.s4 1966171168
        %v440 = vunpack.c.0.s8 %v439
        %v441 = vlaneseq
        %v442 = vshrl.u32 %v441, 7
        %v443 = vsub.s32 %v440, %v442
        %v444 = vrot.slane %v428, %v443
        %v446 = vunpack.c.l.s4 1966171168
        %v447 = vunpack.c.0.s8 %v446
        %v448 = vlaneseq
        %v449 = vshrl.u32 %v448, 7
        %v450 = vsub.s32 %v447, %v449
        %v451 = vrot.slane %v435, %v450
        %v453 = vunpack.c.l.s4 1966171168
        %v454 = vunpack.c.0.s8 %v453
        %v455 = vlaneseq
        %v456 = vshrl.u32 %v455, 7
        %v457 = vsub.s32 %v454, %v456
        %v458 = vrot.slane %v436, %v457
        %v460 = vunpack.c.l.s4 1966171168
        %v461 = vunpack.c.0.s8 %v460
        %v462 = vlaneseq
        %v463 = vshrl.u32 %v462, 7
        %v464 = vsub.s32 %v461, %v463
        %v465 = vrot.slane %v437, %v464
        %v466 = vcombine.high %v444, %v444
        %v467 = vcombine.high %v451, %v451
        %v468 = vcombine.high %v458, %v458
        %v469 = vcombine.high %v465, %v465
        %v470 = vlaneseq
        %v471 = vshrl.u32 %v470, 7
        %v472 = vsub.s32 0, %v471
        %v473 = vrot.slane %v444, %v472
        %v474 = vlaneseq
        %v475 = vshrl.u32 %v474, 7
        %v476 = vsub.s32 1, %v475
        %v477 = vrot.slane %v444, %v476
        %v478 = vlaneseq
        %v479 = vshrl.u32 %v478, 7
        %v480 = vsub.s32 0, %v479
        %v481 = vrot.slane %v458, %v480
        %v482 = vlaneseq
        %v483 = vshrl.u32 %v482, 7
        %v484 = vsub.s32 1, %v483
        %v485 = vrot.slane %v458, %v484
        %v486 = vlaneseq
        %v487 = vshrl.u32 %v486, 7
        %v488 = vsub.s32 0, %v487
        %v489 = vrot.slane %v466, %v488
        %v490 = vlaneseq
        %v491 = vshrl.u32 %v490, 7
        %v492 = vsub.s32 1, %v491
        %v493 = vrot.slane %v466, %v492
        %v494 = vlaneseq
        %v495 = vshrl.u32 %v494, 7
        %v496 = vsub.s32 0, %v495
        %v497 = vrot.slane %v468, %v496
        %v498 = vlaneseq
        %v499 = vshrl.u32 %v498, 7
        %v500 = vsub.s32 1, %v499
        %v501 = vrot.slane %v468, %v500
        %v502 = vlaneseq
        %v503 = vshrl.u32 %v502, 7
        %v504 = vsub.s32 0, %v503
        %v505 = vrot.slane %v451, %v504
        %v506 = vlaneseq
        %v507 = vshrl.u32 %v506, 7
        %v508 = vsub.s32 1, %v507
        %v509 = vrot.slane %v451, %v508
        %v510 = vlaneseq
        %v511 = vshrl.u32 %v510, 7
        %v512 = vsub.s32 0, %v511
        %v513 = vrot.slane %v465, %v512
        %v514 = vlaneseq
        %v515 = vshrl.u32 %v514, 7
        %v516 = vsub.s32 1, %v515
        %v517 = vrot.slane %v465, %v516
        %v518 = vlaneseq
        %v519 = vshrl.u32 %v518, 7
        %v520 = vsub.s32 0, %v519
        %v521 = vrot.slane %v467, %v520
        %v522 = vlaneseq
        %v523 = vshrl.u32 %v522, 7
        %v524 = vsub.s32 1, %v523
        %v525 = vrot.slane %v467, %v524
        %v526 = vlaneseq
        %v527 = vshrl.u32 %v526, 7
        %v528 = vsub.s32 0, %v527
        %v529 = vrot.slane %v469, %v528
        %v530 = vlaneseq
        %v531 = vshrl.u32 %v530, 7
        %v532 = vsub.s32 1, %v531
        %v533 = vrot.slane %v469, %v532
        %534 = vrot.lane.b32.xlu0 %v473, 126
        %v535 = vpop.permute.xlu0 %534
        %536 = vrot.lane.b32.xlu0 %v477, 126
        %v537 = vpop.permute.xlu0 %536
        %538 = vrot.lane.b32.xlu0 %v481, 126
        %v539 = vpop.permute.xlu0 %538
        %540 = vrot.lane.b32.xlu0 %v485, 126
        %v541 = vpop.permute.xlu0 %540
        %542 = vrot.lane.b32.xlu0 %v489, 126
        %v543 = vpop.permute.xlu0 %542
        %544 = vrot.lane.b32.xlu0 %v493, 126
        %v545 = vpop.permute.xlu0 %544
        %546 = vrot.lane.b32.xlu0 %v497, 126
        %v547 = vpop.permute.xlu0 %546
        %548 = vrot.lane.b32.xlu0 %v501, 126
        %v549 = vpop.permute.xlu0 %548
        %550 = vrot.lane.b32.xlu0 %v505, 126
        %v551 = vpop.permute.xlu0 %550
        %552 = vrot.lane.b32.xlu0 %v509, 126
        %v553 = vpop.permute.xlu0 %552
        %554 = vrot.lane.b32.xlu0 %v513, 126
        %v555 = vpop.permute.xlu0 %554
        %556 = vrot.lane.b32.xlu0 %v517, 126
        %v557 = vpop.permute.xlu0 %556
        %558 = vrot.lane.b32.xlu0 %v521, 126
        %v559 = vpop.permute.xlu0 %558
        %560 = vrot.lane.b32.xlu0 %v525, 126
        %v561 = vpop.permute.xlu0 %560
        %562 = vrot.lane.b32.xlu0 %v529, 126
        %v563 = vpop.permute.xlu0 %562
        %564 = vrot.lane.b32.xlu0 %v533, 126
        %v565 = vpop.permute.xlu0 %564
        %vm566 = vcmask 1031168
        %v567 = vsel %vm566, %v535, %v537
        %v568 = vsel %vm566, %v539, %v541
        %v569 = vsel %vm566, %v543, %v545
        %v570 = vsel %vm566, %v547, %v549
        %v571 = vsel %vm566, %v551, %v553
        %v572 = vsel %vm566, %v555, %v557
        %v573 = vsel %vm566, %v559, %v561
        %v574 = vsel %vm566, %v563, %v565
        %583 = vst [vmem:[#allocation2 + $0x2] sm:$0x1] %v567
        %584 = vst [vmem:[#allocation2 + $0xa] sm:$0x1] %v568
        %585 = vst [vmem:[#allocation2 + $0x12] sm:$0x1] %v569
        %586 = vst [vmem:[#allocation2 + $0x1a] sm:$0x1] %v570
        %587 = vst [vmem:[#allocation2 + $0x22] sm:$0x1] %v571
        %588 = vst [vmem:[#allocation2 + $0x2a] sm:$0x1] %v572
        %589 = vst [vmem:[#allocation2 + $0x32] sm:$0x1] %v573
        %590 = vst [vmem:[#allocation2 + $0x3a] sm:$0x1] %v574
        %v591 = vld [vmem:[%s148] sm:$0xff]
        %v592 = vld [vmem:[%s148 + $0x8] sm:$0xff]
        %v595 = vcombine.low %v591, %v592
        %v596 = vcombine.high %v591, %v592
        %v598 = vunpack.c.l.s4 1966171168
        %v599 = vunpack.c.0.s8 %v598
        %v600 = vlaneseq
        %v601 = vshrl.u32 %v600, 7
        %v602 = vsub.s32 %v599, %v601
        %v603 = vrot.slane %v595, %v602
        %v605 = vunpack.c.l.s4 1966171168
        %v606 = vunpack.c.0.s8 %v605
        %v607 = vlaneseq
        %v608 = vshrl.u32 %v607, 7
        %v609 = vsub.s32 %v606, %v608
        %v610 = vrot.slane %v596, %v609
        %v611 = vcombine.high %v603, %v603
        %v612 = vcombine.high %v610, %v610
        %v614 = vunpack.c.l.s4 1966171168
        %v615 = vunpack.c.0.s8 %v614
        %v616 = vlaneseq
        %v617 = vshrl.u32 %v616, 7
        %v618 = vsub.s32 %v615, %v617
        %v619 = vrot.slane %v603, %v618
        %v621 = vunpack.c.l.s4 1966171168
        %v622 = vunpack.c.0.s8 %v621
        %v623 = vlaneseq
        %v624 = vshrl.u32 %v623, 7
        %v625 = vsub.s32 %v622, %v624
        %v626 = vrot.slane %v610, %v625
        %v628 = vunpack.c.l.s4 1966171168
        %v629 = vunpack.c.0.s8 %v628
        %v630 = vlaneseq
        %v631 = vshrl.u32 %v630, 7
        %v632 = vsub.s32 %v629, %v631
        %v633 = vrot.slane %v611, %v632
        %v635 = vunpack.c.l.s4 1966171168
        %v636 = vunpack.c.0.s8 %v635
        %v637 = vlaneseq
        %v638 = vshrl.u32 %v637, 7
        %v639 = vsub.s32 %v636, %v638
        %v640 = vrot.slane %v612, %v639
        %v641 = vcombine.high %v619, %v619
        %v642 = vcombine.high %v626, %v626
        %v643 = vcombine.high %v633, %v633
        %v644 = vcombine.high %v640, %v640
        %v645 = vlaneseq
        %v646 = vshrl.u32 %v645, 7
        %v647 = vsub.s32 0, %v646
        %v648 = vrot.slane %v619, %v647
        %v649 = vlaneseq
        %v650 = vshrl.u32 %v649, 7
        %v651 = vsub.s32 1, %v650
        %v652 = vrot.slane %v619, %v651
        %v653 = vlaneseq
        %v654 = vshrl.u32 %v653, 7
        %v655 = vsub.s32 0, %v654
        %v656 = vrot.slane %v633, %v655
        %v657 = vlaneseq
        %v658 = vshrl.u32 %v657, 7
        %v659 = vsub.s32 1, %v658
        %v660 = vrot.slane %v633, %v659
        %v661 = vlaneseq
        %v662 = vshrl.u32 %v661, 7
        %v663 = vsub.s32 0, %v662
        %v664 = vrot.slane %v641, %v663
        %v665 = vlaneseq
        %v666 = vshrl.u32 %v665, 7
        %v667 = vsub.s32 1, %v666
        %v668 = vrot.slane %v641, %v667
        %v669 = vlaneseq
        %v670 = vshrl.u32 %v669, 7
        %v671 = vsub.s32 0, %v670
        %v672 = vrot.slane %v643, %v671
        %v673 = vlaneseq
        %v674 = vshrl.u32 %v673, 7
        %v675 = vsub.s32 1, %v674
        %v676 = vrot.slane %v643, %v675
        %v677 = vlaneseq
        %v678 = vshrl.u32 %v677, 7
        %v679 = vsub.s32 0, %v678
        %v680 = vrot.slane %v626, %v679
        %v681 = vlaneseq
        %v682 = vshrl.u32 %v681, 7
        %v683 = vsub.s32 1, %v682
        %v684 = vrot.slane %v626, %v683
        %v685 = vlaneseq
        %v686 = vshrl.u32 %v685, 7
        %v687 = vsub.s32 0, %v686
        %v688 = vrot.slane %v640, %v687
        %v689 = vlaneseq
        %v690 = vshrl.u32 %v689, 7
        %v691 = vsub.s32 1, %v690
        %v692 = vrot.slane %v640, %v691
        %v693 = vlaneseq
        %v694 = vshrl.u32 %v693, 7
        %v695 = vsub.s32 0, %v694
        %v696 = vrot.slane %v642, %v695
        %v697 = vlaneseq
        %v698 = vshrl.u32 %v697, 7
        %v699 = vsub.s32 1, %v698
        %v700 = vrot.slane %v642, %v699
        %v701 = vlaneseq
        %v702 = vshrl.u32 %v701, 7
        %v703 = vsub.s32 0, %v702
        %v704 = vrot.slane %v644, %v703
        %v705 = vlaneseq
        %v706 = vshrl.u32 %v705, 7
        %v707 = vsub.s32 1, %v706
        %v708 = vrot.slane %v644, %v707
        %709 = vrot.lane.b32.xlu0 %v648, 125
        %v710 = vpop.permute.xlu0 %709
        %711 = vrot.lane.b32.xlu0 %v652, 125
        %v712 = vpop.permute.xlu0 %711
        %713 = vrot.lane.b32.xlu0 %v656, 125
        %v714 = vpop.permute.xlu0 %713
        %715 = vrot.lane.b32.xlu0 %v660, 125
        %v716 = vpop.permute.xlu0 %715
        %717 = vrot.lane.b32.xlu0 %v664, 125
        %v718 = vpop.permute.xlu0 %717
        %719 = vrot.lane.b32.xlu0 %v668, 125
        %v720 = vpop.permute.xlu0 %719
        %721 = vrot.lane.b32.xlu0 %v672, 125
        %v722 = vpop.permute.xlu0 %721
        %723 = vrot.lane.b32.xlu0 %v676, 125
        %v724 = vpop.permute.xlu0 %723
        %725 = vrot.lane.b32.xlu0 %v680, 125
        %v726 = vpop.permute.xlu0 %725
        %727 = vrot.lane.b32.xlu0 %v684, 125
        %v728 = vpop.permute.xlu0 %727
        %729 = vrot.lane.b32.xlu0 %v688, 125
        %v730 = vpop.permute.xlu0 %729
        %731 = vrot.lane.b32.xlu0 %v692, 125
        %v732 = vpop.permute.xlu0 %731
        %733 = vrot.lane.b32.xlu0 %v696, 125
        %v734 = vpop.permute.xlu0 %733
        %735 = vrot.lane.b32.xlu0 %v700, 125
        %v736 = vpop.permute.xlu0 %735
        %737 = vrot.lane.b32.xlu0 %v704, 125
        %v738 = vpop.permute.xlu0 %737
        %739 = vrot.lane.b32.xlu0 %v708, 125
        %v740 = vpop.permute.xlu0 %739
        %vm741 = vcmask 1022976
        %v742 = vsel %vm741, %v710, %v712
        %v743 = vsel %vm741, %v714, %v716
        %v744 = vsel %vm741, %v718, %v720
        %v745 = vsel %vm741, %v722, %v724
        %v746 = vsel %vm741, %v726, %v728
        %v747 = vsel %vm741, %v730, %v732
        %v748 = vsel %vm741, %v734, %v736
        %v749 = vsel %vm741, %v738, %v740
        %758 = vst [vmem:[#allocation2 + $0x3] sm:$0x1] %v742
        %759 = vst [vmem:[#allocation2 + $0xb] sm:$0x1] %v743
        %760 = vst [vmem:[#allocation2 + $0x13] sm:$0x1] %v744
        %761 = vst [vmem:[#allocation2 + $0x1b] sm:$0x1] %v745
        %762 = vst [vmem:[#allocation2 + $0x23] sm:$0x1] %v746
        %763 = vst [vmem:[#allocation2 + $0x2b] sm:$0x1] %v747
        %764 = vst [vmem:[#allocation2 + $0x33] sm:$0x1] %v748
        %765 = vst [vmem:[#allocation2 + $0x3b] sm:$0x1] %v749
        %766 = vst [vmem:[#allocation2 + $0x4] sm:$0x1] 1.0
        %767 = vst [vmem:[#allocation2 + $0xc] sm:$0x1] 1.0
        %768 = vst [vmem:[#allocation2 + $0x14] sm:$0x1] 1.0
        %769 = vst [vmem:[#allocation2 + $0x1c] sm:$0x1] 1.0
        %770 = vst [vmem:[#allocation2 + $0x24] sm:$0x1] 1.0
        %771 = vst [vmem:[#allocation2 + $0x2c] sm:$0x1] 1.0
        %772 = vst [vmem:[#allocation2 + $0x34] sm:$0x1] 1.0
        %773 = vst [vmem:[#allocation2 + $0x3c] sm:$0x1] 1.0
        %v774 = vld [vmem:[#allocation2] sm:$0x1f]
        %v775 = vld [vmem:[#allocation2 + $0x8] sm:$0x1f]
        %v776 = vld [vmem:[#allocation2 + $0x10] sm:$0x1f]
        %v777 = vld [vmem:[#allocation2 + $0x18] sm:$0x1f]
        %v778 = vld [vmem:[#allocation2 + $0x20] sm:$0x1f]
        %v779 = vld [vmem:[#allocation2 + $0x28] sm:$0x1f]
        %v780 = vld [vmem:[#allocation2 + $0x30] sm:$0x1f]
        %v781 = vld [vmem:[#allocation2 + $0x38] sm:$0x1f]
        %v782 = vld [vmem:[#allocation6] sm:$0xff]
        %vm783 = vcmask 39936
        %v785 = vsel %vm783, %v782, 0
        %vm787 = vcmask 1044480
        %v789 = vsel %vm787, %v774, 0
        %791 = vmatprep.subr.mxu0 0.0
        %792 = vmatpush1.msra.mxu0 %v789
        %793 = vmatprep.subr.mxu0 0.0
        %794 = vmatpush1.msra.mxu0 0.0
        %795 = vmatprep.subr.mxu0 0.0
        %796 = vmatpush1.msra.mxu0 0.0
        %797 = vmatprep.subr.mxu0 0.0
        %798 = vmatpush1.msra.mxu0 0.0
        %799 = vmatprep.subr.mxu0 0.0
        %800 = vmatpush1.msra.mxu0 0.0
        %801 = vmatprep.subr.mxu0 0.0
        %802 = vmatpush1.msra.mxu0 0.0
        %803 = vmatprep.subr.mxu0 0.0
        %804 = vmatpush1.msra.mxu0 0.0
        %805 = vmatprep.subr.mxu0 0.0
        %806 = vmatpush1.msra.mxu0 0.0
        %807 = vmatprep.subr.mxu0 0.0
        %808 = vmatpush1.msra.mxu0 0.0
        %809 = vmatprep.subr.mxu0 0.0
        %810 = vmatpush1.msra.mxu0 0.0
        %811 = vmatprep.subr.mxu0 0.0
        %812 = vmatpush1.msra.mxu0 0.0
        %813 = vmatprep.subr.mxu0 0.0
        %814 = vmatpush1.msra.mxu0 0.0
        %815 = vmatprep.subr.mxu0 0.0
        %816 = vmatpush1.msra.mxu0 0.0
        %817 = vmatprep.subr.mxu0 0.0
        %818 = vmatpush1.msra.mxu0 0.0
        %819 = vmatprep.subr.mxu0 0.0
        %820 = vmatpush1.msra.mxu0 0.0
        %821 = vmatprep.subr.mxu0 0.0
        %822 = vmatpush1.msra.mxu0 0.0
        %823 = vmatprep.subr.mxu0 0.0
        %824 = vmatpush1.msra.mxu0 0.0
        %825 = vmatprep.subr.mxu0 0.0
        %826 = vmatpush1.msra.mxu0 0.0
        %827 = vmatprep.subr.mxu0 0.0
        %828 = vmatpush1.msra.mxu0 0.0
        %829 = vmatprep.subr.mxu0 0.0
        %830 = vmatpush1.msra.mxu0 0.0
        %831 = vmatprep.subr.mxu0 0.0
        %832 = vmatpush1.msra.mxu0 0.0
        %833 = vmatprep.subr.mxu0 0.0
        %834 = vmatpush1.msra.mxu0 0.0
        %835 = vmatprep.subr.mxu0 0.0
        %836 = vmatpush1.msra.mxu0 0.0
        %837 = vmatprep.subr.mxu0 0.0
        %838 = vmatpush1.msra.mxu0 0.0
        %839 = vmatprep.subr.mxu0 0.0
        %840 = vmatpush1.msra.mxu0 0.0
        %841 = vmatprep.subr.mxu0 0.0
        %842 = vmatpush1.msra.mxu0 0.0
        %843 = vmatprep.subr.mxu0 0.0
        %844 = vmatpush1.msra.mxu0 0.0
        %845 = vmatprep.subr.mxu0 0.0
        %846 = vmatpush1.msra.mxu0 0.0
        %847 = vmatprep.subr.mxu0 0.0
        %848 = vmatpush1.msra.mxu0 0.0
        %849 = vmatprep.subr.mxu0 0.0
        %850 = vmatpush1.msra.mxu0 0.0
        %851 = vmatprep.subr.mxu0 0.0
        %852 = vmatpush1.msra.mxu0 0.0
        %853 = vmatprep.subr.mxu0 0.0
        %854 = vmatpush1.msra.mxu0 0.0
        %855 = vmatprep.mubr.f32.mxu0 0.0
        %856 = vmatmul.mubr.f32.gmra.mrb[0].mxu0 %v785
        %v857 = vpop.f32.mrb[0].mxu0
        %v858 = vadd.f32 0.0, %v857
        %v859 = vpop.f32.mrb[0].mxu0
        %860 = vdwg.mxu0
        %v862 = vsel %vm787, %v775, 0
        %864 = vmatprep.subr.mxu0 0.0
        %865 = vmatpush1.msra.mxu0 %v862
        %866 = vmatprep.subr.mxu0 0.0
        %867 = vmatpush1.msra.mxu0 0.0
        %868 = vmatprep.subr.mxu0 0.0
        %869 = vmatpush1.msra.mxu0 0.0
        %870 = vmatprep.subr.mxu0 0.0
        %871 = vmatpush1.msra.mxu0 0.0
        %872 = vmatprep.subr.mxu0 0.0
        %873 = vmatpush1.msra.mxu0 0.0
        %874 = vmatprep.subr.mxu0 0.0
        %875 = vmatpush1.msra.mxu0 0.0
        %876 = vmatprep.subr.mxu0 0.0
        %877 = vmatpush1.msra.mxu0 0.0
        %878 = vmatprep.subr.mxu0 0.0
        %879 = vmatpush1.msra.mxu0 0.0
        %880 = vmatprep.subr.mxu0 0.0
        %881 = vmatpush1.msra.mxu0 0.0
        %882 = vmatprep.subr.mxu0 0.0
        %883 = vmatpush1.msra.mxu0 0.0
        %884 = vmatprep.subr.mxu0 0.0
        %885 = vmatpush1.msra.mxu0 0.0
        %886 = vmatprep.subr.mxu0 0.0
        %887 = vmatpush1.msra.mxu0 0.0
        %888 = vmatprep.subr.mxu0 0.0
        %889 = vmatpush1.msra.mxu0 0.0
        %890 = vmatprep.subr.mxu0 0.0
        %891 = vmatpush1.msra.mxu0 0.0
        %892 = vmatprep.subr.mxu0 0.0
        %893 = vmatpush1.msra.mxu0 0.0
        %894 = vmatprep.subr.mxu0 0.0
        %895 = vmatpush1.msra.mxu0 0.0
        %896 = vmatprep.subr.mxu0 0.0
        %897 = vmatpush1.msra.mxu0 0.0
        %898 = vmatprep.subr.mxu0 0.0
        %899 = vmatpush1.msra.mxu0 0.0
        %900 = vmatprep.subr.mxu0 0.0
        %901 = vmatpush1.msra.mxu0 0.0
        %902 = vmatprep.subr.mxu0 0.0
        %903 = vmatpush1.msra.mxu0 0.0
        %904 = vmatprep.subr.mxu0 0.0
        %905 = vmatpush1.msra.mxu0 0.0
        %906 = vmatprep.subr.mxu0 0.0
        %907 = vmatpush1.msra.mxu0 0.0
        %908 = vmatprep.subr.mxu0 0.0
        %909 = vmatpush1.msra.mxu0 0.0
        %910 = vmatprep.subr.mxu0 0.0
        %911 = vmatpush1.msra.mxu0 0.0
        %912 = vmatprep.subr.mxu0 0.0
        %913 = vmatpush1.msra.mxu0 0.0
        %914 = vmatprep.subr.mxu0 0.0
        %915 = vmatpush1.msra.mxu0 0.0
        %916 = vmatprep.subr.mxu0 0.0
        %917 = vmatpush1.msra.mxu0 0.0
        %918 = vmatprep.subr.mxu0 0.0
        %919 = vmatpush1.msra.mxu0 0.0
        %920 = vmatprep.subr.mxu0 0.0
        %921 = vmatpush1.msra.mxu0 0.0
        %922 = vmatprep.subr.mxu0 0.0
        %923 = vmatpush1.msra.mxu0 0.0
        %924 = vmatprep.subr.mxu0 0.0
        %925 = vmatpush1.msra.mxu0 0.0
        %926 = vmatprep.subr.mxu0 0.0
        %927 = vmatpush1.msra.mxu0 0.0
        %928 = vmatprep.mubr.f32.mxu0 0.0
        %929 = vmatmul.mubr.f32.gmra.mrb[0].mxu0 %v785
        %v930 = vpop.f32.mrb[0].mxu0
        %v931 = vadd.f32 0.0, %v930
        %v932 = vpop.f32.mrb[0].mxu0
        %933 = vdwg.mxu0
        %v935 = vsel %vm787, %v776, 0
        %937 = vmatprep.subr.mxu0 0.0
        %938 = vmatpush1.msra.mxu0 %v935
        %939 = vmatprep.subr.mxu0 0.0
        %940 = vmatpush1.msra.mxu0 0.0
        %941 = vmatprep.subr.mxu0 0.0
        %942 = vmatpush1.msra.mxu0 0.0
        %943 = vmatprep.subr.mxu0 0.0
        %944 = vmatpush1.msra.mxu0 0.0
        %945 = vmatprep.subr.mxu0 0.0
        %946 = vmatpush1.msra.mxu0 0.0
        %947 = vmatprep.subr.mxu0 0.0
        %948 = vmatpush1.msra.mxu0 0.0
        %949 = vmatprep.subr.mxu0 0.0
        %950 = vmatpush1.msra.mxu0 0.0
        %951 = vmatprep.subr.mxu0 0.0
        %952 = vmatpush1.msra.mxu0 0.0
        %953 = vmatprep.subr.mxu0 0.0
        %954 = vmatpush1.msra.mxu0 0.0
        %955 = vmatprep.subr.mxu0 0.0
        %956 = vmatpush1.msra.mxu0 0.0
        %957 = vmatprep.subr.mxu0 0.0
        %958 = vmatpush1.msra.mxu0 0.0
        %959 = vmatprep.subr.mxu0 0.0
        %960 = vmatpush1.msra.mxu0 0.0
        %961 = vmatprep.subr.mxu0 0.0
        %962 = vmatpush1.msra.mxu0 0.0
        %963 = vmatprep.subr.mxu0 0.0
        %964 = vmatpush1.msra.mxu0 0.0
        %965 = vmatprep.subr.mxu0 0.0
        %966 = vmatpush1.msra.mxu0 0.0
        %967 = vmatprep.subr.mxu0 0.0
        %968 = vmatpush1.msra.mxu0 0.0
        %969 = vmatprep.subr.mxu0 0.0
        %970 = vmatpush1.msra.mxu0 0.0
        %971 = vmatprep.subr.mxu0 0.0
        %972 = vmatpush1.msra.mxu0 0.0
        %973 = vmatprep.subr.mxu0 0.0
        %974 = vmatpush1.msra.mxu0 0.0
        %975 = vmatprep.subr.mxu0 0.0
        %976 = vmatpush1.msra.mxu0 0.0
        %977 = vmatprep.subr.mxu0 0.0
        %978 = vmatpush1.msra.mxu0 0.0
        %979 = vmatprep.subr.mxu0 0.0
        %980 = vmatpush1.msra.mxu0 0.0
        %981 = vmatprep.subr.mxu0 0.0
        %982 = vmatpush1.msra.mxu0 0.0
        %983 = vmatprep.subr.mxu0 0.0
        %984 = vmatpush1.msra.mxu0 0.0
        %985 = vmatprep.subr.mxu0 0.0
        %986 = vmatpush1.msra.mxu0 0.0
        %987 = vmatprep.subr.mxu0 0.0
        %988 = vmatpush1.msra.mxu0 0.0
        %989 = vmatprep.subr.mxu0 0.0
        %990 = vmatpush1.msra.mxu0 0.0
        %991 = vmatprep.subr.mxu0 0.0
        %992 = vmatpush1.msra.mxu0 0.0
        %993 = vmatprep.subr.mxu0 0.0
        %994 = vmatpush1.msra.mxu0 0.0
        %995 = vmatprep.subr.mxu0 0.0
        %996 = vmatpush1.msra.mxu0 0.0
        %997 = vmatprep.subr.mxu0 0.0
        %998 = vmatpush1.msra.mxu0 0.0
        %999 = vmatprep.subr.mxu0 0.0
        %1000 = vmatpush1.msra.mxu0 0.0
        %1001 = vmatprep.mubr.f32.mxu0 0.0
        %1002 = vmatmul.mubr.f32.gmra.mrb[0].mxu0 %v785
        %v1003 = vpop.f32.mrb[0].mxu0
        %v1004 = vadd.f32 0.0, %v1003
        %v1005 = vpop.f32.mrb[0].mxu0
        %1006 = vdwg.mxu0
        %v1008 = vsel %vm787, %v777, 0
        %1010 = vmatprep.subr.mxu0 0.0
        %1011 = vmatpush1.msra.mxu0 %v1008
        %1012 = vmatprep.subr.mxu0 0.0
        %1013 = vmatpush1.msra.mxu0 0.0
        %1014 = vmatprep.subr.mxu0 0.0
        %1015 = vmatpush1.msra.mxu0 0.0
        %1016 = vmatprep.subr.mxu0 0.0
        %1017 = vmatpush1.msra.mxu0 0.0
        %1018 = vmatprep.subr.mxu0 0.0
        %1019 = vmatpush1.msra.mxu0 0.0
        %1020 = vmatprep.subr.mxu0 0.0
        %1021 = vmatpush1.msra.mxu0 0.0
        %1022 = vmatprep.subr.mxu0 0.0
        %1023 = vmatpush1.msra.mxu0 0.0
        %1024 = vmatprep.subr.mxu0 0.0
        %1025 = vmatpush1.msra.mxu0 0.0
        %1026 = vmatprep.subr.mxu0 0.0
        %1027 = vmatpush1.msra.mxu0 0.0
        %1028 = vmatprep.subr.mxu0 0.0
        %1029 = vmatpush1.msra.mxu0 0.0
        %1030 = vmatprep.subr.mxu0 0.0
        %1031 = vmatpush1.msra.mxu0 0.0
        %1032 = vmatprep.subr.mxu0 0.0
        %1033 = vmatpush1.msra.mxu0 0.0
        %1034 = vmatprep.subr.mxu0 0.0
        %1035 = vmatpush1.msra.mxu0 0.0
        %1036 = vmatprep.subr.mxu0 0.0
        %1037 = vmatpush1.msra.mxu0 0.0
        %1038 = vmatprep.subr.mxu0 0.0
        %1039 = vmatpush1.msra.mxu0 0.0
        %1040 = vmatprep.subr.mxu0 0.0
        %1041 = vmatpush1.msra.mxu0 0.0
        %1042 = vmatprep.subr.mxu0 0.0
        %1043 = vmatpush1.msra.mxu0 0.0
        %1044 = vmatprep.subr.mxu0 0.0
        %1045 = vmatpush1.msra.mxu0 0.0
        %1046 = vmatprep.subr.mxu0 0.0
        %1047 = vmatpush1.msra.mxu0 0.0
        %1048 = vmatprep.subr.mxu0 0.0
        %1049 = vmatpush1.msra.mxu0 0.0
        %1050 = vmatprep.subr.mxu0 0.0
        %1051 = vmatpush1.msra.mxu0 0.0
        %1052 = vmatprep.subr.mxu0 0.0
        %1053 = vmatpush1.msra.mxu0 0.0
        %1054 = vmatprep.subr.mxu0 0.0
        %1055 = vmatpush1.msra.mxu0 0.0
        %1056 = vmatprep.subr.mxu0 0.0
        %1057 = vmatpush1.msra.mxu0 0.0
        %1058 = vmatprep.subr.mxu0 0.0
        %1059 = vmatpush1.msra.mxu0 0.0
        %1060 = vmatprep.subr.mxu0 0.0
        %1061 = vmatpush1.msra.mxu0 0.0
        %1062 = vmatprep.subr.mxu0 0.0
        %1063 = vmatpush1.msra.mxu0 0.0
        %1064 = vmatprep.subr.mxu0 0.0
        %1065 = vmatpush1.msra.mxu0 0.0
        %1066 = vmatprep.subr.mxu0 0.0
        %1067 = vmatpush1.msra.mxu0 0.0
        %1068 = vmatprep.subr.mxu0 0.0
        %1069 = vmatpush1.msra.mxu0 0.0
        %1070 = vmatprep.subr.mxu0 0.0
        %1071 = vmatpush1.msra.mxu0 0.0
        %1072 = vmatprep.subr.mxu0 0.0
        %1073 = vmatpush1.msra.mxu0 0.0
        %1074 = vmatprep.mubr.f32.mxu0 0.0
        %1075 = vmatmul.mubr.f32.gmra.mrb[0].mxu0 %v785
        %v1076 = vpop.f32.mrb[0].mxu0
        %v1077 = vadd.f32 0.0, %v1076
        %v1078 = vpop.f32.mrb[0].mxu0
        %1079 = vdwg.mxu0
        %v1081 = vsel %vm787, %v778, 0
        %1083 = vmatprep.subr.mxu0 0.0
        %1084 = vmatpush1.msra.mxu0 %v1081
        %1085 = vmatprep.subr.mxu0 0.0
        %1086 = vmatpush1.msra.mxu0 0.0
        %1087 = vmatprep.subr.mxu0 0.0
        %1088 = vmatpush1.msra.mxu0 0.0
        %1089 = vmatprep.subr.mxu0 0.0
        %1090 = vmatpush1.msra.mxu0 0.0
        %1091 = vmatprep.subr.mxu0 0.0
        %1092 = vmatpush1.msra.mxu0 0.0
        %1093 = vmatprep.subr.mxu0 0.0
        %1094 = vmatpush1.msra.mxu0 0.0
        %1095 = vmatprep.subr.mxu0 0.0
        %1096 = vmatpush1.msra.mxu0 0.0
        %1097 = vmatprep.subr.mxu0 0.0
        %1098 = vmatpush1.msra.mxu0 0.0
        %1099 = vmatprep.subr.mxu0 0.0
        %1100 = vmatpush1.msra.mxu0 0.0
        %1101 = vmatprep.subr.mxu0 0.0
        %1102 = vmatpush1.msra.mxu0 0.0
        %1103 = vmatprep.subr.mxu0 0.0
        %1104 = vmatpush1.msra.mxu0 0.0
        %1105 = vmatprep.subr.mxu0 0.0
        %1106 = vmatpush1.msra.mxu0 0.0
        %1107 = vmatprep.subr.mxu0 0.0
        %1108 = vmatpush1.msra.mxu0 0.0
        %1109 = vmatprep.subr.mxu0 0.0
        %1110 = vmatpush1.msra.mxu0 0.0
        %1111 = vmatprep.subr.mxu0 0.0
        %1112 = vmatpush1.msra.mxu0 0.0
        %1113 = vmatprep.subr.mxu0 0.0
        %1114 = vmatpush1.msra.mxu0 0.0
        %1115 = vmatprep.subr.mxu0 0.0
        %1116 = vmatpush1.msra.mxu0 0.0
        %1117 = vmatprep.subr.mxu0 0.0
        %1118 = vmatpush1.msra.mxu0 0.0
        %1119 = vmatprep.subr.mxu0 0.0
        %1120 = vmatpush1.msra.mxu0 0.0
        %1121 = vmatprep.subr.mxu0 0.0
        %1122 = vmatpush1.msra.mxu0 0.0
        %1123 = vmatprep.subr.mxu0 0.0
        %1124 = vmatpush1.msra.mxu0 0.0
        %1125 = vmatprep.subr.mxu0 0.0
        %1126 = vmatpush1.msra.mxu0 0.0
        %1127 = vmatprep.subr.mxu0 0.0
        %1128 = vmatpush1.msra.mxu0 0.0
        %1129 = vmatprep.subr.mxu0 0.0
        %1130 = vmatpush1.msra.mxu0 0.0
        %1131 = vmatprep.subr.mxu0 0.0
        %1132 = vmatpush1.msra.mxu0 0.0
        %1133 = vmatprep.subr.mxu0 0.0
        %1134 = vmatpush1.msra.mxu0 0.0
        %1135 = vmatprep.subr.mxu0 0.0
        %1136 = vmatpush1.msra.mxu0 0.0
        %1137 = vmatprep.subr.mxu0 0.0
        %1138 = vmatpush1.msra.mxu0 0.0
        %1139 = vmatprep.subr.mxu0 0.0
        %1140 = vmatpush1.msra.mxu0 0.0
        %1141 = vmatprep.subr.mxu0 0.0
        %1142 = vmatpush1.msra.mxu0 0.0
        %1143 = vmatprep.subr.mxu0 0.0
        %1144 = vmatpush1.msra.mxu0 0.0
        %1145 = vmatprep.subr.mxu0 0.0
        %1146 = vmatpush1.msra.mxu0 0.0
        %1147 = vmatprep.mubr.f32.mxu0 0.0
        %1148 = vmatmul.mubr.f32.gmra.mrb[0].mxu0 %v785
        %v1149 = vpop.f32.mrb[0].mxu0
        %v1150 = vadd.f32 0.0, %v1149
        %v1151 = vpop.f32.mrb[0].mxu0
        %1152 = vdwg.mxu0
        %v1154 = vsel %vm787, %v779, 0
        %1156 = vmatprep.subr.mxu0 0.0
        %1157 = vmatpush1.msra.mxu0 %v1154
        %1158 = vmatprep.subr.mxu0 0.0
        %1159 = vmatpush1.msra.mxu0 0.0
        %1160 = vmatprep.subr.mxu0 0.0
        %1161 = vmatpush1.msra.mxu0 0.0
        %1162 = vmatprep.subr.mxu0 0.0
        %1163 = vmatpush1.msra.mxu0 0.0
        %1164 = vmatprep.subr.mxu0 0.0
        %1165 = vmatpush1.msra.mxu0 0.0
        %1166 = vmatprep.subr.mxu0 0.0
        %1167 = vmatpush1.msra.mxu0 0.0
        %1168 = vmatprep.subr.mxu0 0.0
        %1169 = vmatpush1.msra.mxu0 0.0
        %1170 = vmatprep.subr.mxu0 0.0
        %1171 = vmatpush1.msra.mxu0 0.0
        %1172 = vmatprep.subr.mxu0 0.0
        %1173 = vmatpush1.msra.mxu0 0.0
        %1174 = vmatprep.subr.mxu0 0.0
        %1175 = vmatpush1.msra.mxu0 0.0
        %1176 = vmatprep.subr.mxu0 0.0
        %1177 = vmatpush1.msra.mxu0 0.0
        %1178 = vmatprep.subr.mxu0 0.0
        %1179 = vmatpush1.msra.mxu0 0.0
        %1180 = vmatprep.subr.mxu0 0.0
        %1181 = vmatpush1.msra.mxu0 0.0
        %1182 = vmatprep.subr.mxu0 0.0
        %1183 = vmatpush1.msra.mxu0 0.0
        %1184 = vmatprep.subr.mxu0 0.0
        %1185 = vmatpush1.msra.mxu0 0.0
        %1186 = vmatprep.subr.mxu0 0.0
        %1187 = vmatpush1.msra.mxu0 0.0
        %1188 = vmatprep.subr.mxu0 0.0
        %1189 = vmatpush1.msra.mxu0 0.0
        %1190 = vmatprep.subr.mxu0 0.0
        %1191 = vmatpush1.msra.mxu0 0.0
        %1192 = vmatprep.subr.mxu0 0.0
        %1193 = vmatpush1.msra.mxu0 0.0
        %1194 = vmatprep.subr.mxu0 0.0
        %1195 = vmatpush1.msra.mxu0 0.0
        %1196 = vmatprep.subr.mxu0 0.0
        %1197 = vmatpush1.msra.mxu0 0.0
        %1198 = vmatprep.subr.mxu0 0.0
        %1199 = vmatpush1.msra.mxu0 0.0
        %1200 = vmatprep.subr.mxu0 0.0
        %1201 = vmatpush1.msra.mxu0 0.0
        %1202 = vmatprep.subr.mxu0 0.0
        %1203 = vmatpush1.msra.mxu0 0.0
        %1204 = vmatprep.subr.mxu0 0.0
        %1205 = vmatpush1.msra.mxu0 0.0
        %1206 = vmatprep.subr.mxu0 0.0
        %1207 = vmatpush1.msra.mxu0 0.0
        %1208 = vmatprep.subr.mxu0 0.0
        %1209 = vmatpush1.msra.mxu0 0.0
        %1210 = vmatprep.subr.mxu0 0.0
        %1211 = vmatpush1.msra.mxu0 0.0
        %1212 = vmatprep.subr.mxu0 0.0
        %1213 = vmatpush1.msra.mxu0 0.0
        %1214 = vmatprep.subr.mxu0 0.0
        %1215 = vmatpush1.msra.mxu0 0.0
        %1216 = vmatprep.subr.mxu0 0.0
        %1217 = vmatpush1.msra.mxu0 0.0
        %1218 = vmatprep.subr.mxu0 0.0
        %1219 = vmatpush1.msra.mxu0 0.0
        %1220 = vmatprep.mubr.f32.mxu0 0.0
        %1221 = vmatmul.mubr.f32.gmra.mrb[0].mxu0 %v785
        %v1222 = vpop.f32.mrb[0].mxu0
        %v1223 = vadd.f32 0.0, %v1222
        %v1224 = vpop.f32.mrb[0].mxu0
        %1225 = vdwg.mxu0
        %v1227 = vsel %vm787, %v780, 0
        %1229 = vmatprep.subr.mxu0 0.0
        %1230 = vmatpush1.msra.mxu0 %v1227
        %1231 = vmatprep.subr.mxu0 0.0
        %1232 = vmatpush1.msra.mxu0 0.0
        %1233 = vmatprep.subr.mxu0 0.0
        %1234 = vmatpush1.msra.mxu0 0.0
        %1235 = vmatprep.subr.mxu0 0.0
        %1236 = vmatpush1.msra.mxu0 0.0
        %1237 = vmatprep.subr.mxu0 0.0
        %1238 = vmatpush1.msra.mxu0 0.0
        %1239 = vmatprep.subr.mxu0 0.0
        %1240 = vmatpush1.msra.mxu0 0.0
        %1241 = vmatprep.subr.mxu0 0.0
        %1242 = vmatpush1.msra.mxu0 0.0
        %1243 = vmatprep.subr.mxu0 0.0
        %1244 = vmatpush1.msra.mxu0 0.0
        %1245 = vmatprep.subr.mxu0 0.0
        %1246 = vmatpush1.msra.mxu0 0.0
        %1247 = vmatprep.subr.mxu0 0.0
        %1248 = vmatpush1.msra.mxu0 0.0
        %1249 = vmatprep.subr.mxu0 0.0
        %1250 = vmatpush1.msra.mxu0 0.0
        %1251 = vmatprep.subr.mxu0 0.0
        %1252 = vmatpush1.msra.mxu0 0.0
        %1253 = vmatprep.subr.mxu0 0.0
        %1254 = vmatpush1.msra.mxu0 0.0
        %1255 = vmatprep.subr.mxu0 0.0
        %1256 = vmatpush1.msra.mxu0 0.0
        %1257 = vmatprep.subr.mxu0 0.0
        %1258 = vmatpush1.msra.mxu0 0.0
        %1259 = vmatprep.subr.mxu0 0.0
        %1260 = vmatpush1.msra.mxu0 0.0
        %1261 = vmatprep.subr.mxu0 0.0
        %1262 = vmatpush1.msra.mxu0 0.0
        %1263 = vmatprep.subr.mxu0 0.0
        %1264 = vmatpush1.msra.mxu0 0.0
        %1265 = vmatprep.subr.mxu0 0.0
        %1266 = vmatpush1.msra.mxu0 0.0
        %1267 = vmatprep.subr.mxu0 0.0
        %1268 = vmatpush1.msra.mxu0 0.0
        %1269 = vmatprep.subr.mxu0 0.0
        %1270 = vmatpush1.msra.mxu0 0.0
        %1271 = vmatprep.subr.mxu0 0.0
        %1272 = vmatpush1.msra.mxu0 0.0
        %1273 = vmatprep.subr.mxu0 0.0
        %1274 = vmatpush1.msra.mxu0 0.0
        %1275 = vmatprep.subr.mxu0 0.0
        %1276 = vmatpush1.msra.mxu0 0.0
        %1277 = vmatprep.subr.mxu0 0.0
        %1278 = vmatpush1.msra.mxu0 0.0
        %1279 = vmatprep.subr.mxu0 0.0
        %1280 = vmatpush1.msra.mxu0 0.0
        %1281 = vmatprep.subr.mxu0 0.0
        %1282 = vmatpush1.msra.mxu0 0.0
        %1283 = vmatprep.subr.mxu0 0.0
        %1284 = vmatpush1.msra.mxu0 0.0
        %1285 = vmatprep.subr.mxu0 0.0
        %1286 = vmatpush1.msra.mxu0 0.0
        %1287 = vmatprep.subr.mxu0 0.0
        %1288 = vmatpush1.msra.mxu0 0.0
        %1289 = vmatprep.subr.mxu0 0.0
        %1290 = vmatpush1.msra.mxu0 0.0
        %1291 = vmatprep.subr.mxu0 0.0
        %1292 = vmatpush1.msra.mxu0 0.0
        %1293 = vmatprep.mubr.f32.mxu0 0.0
        %1294 = vmatmul.mubr.f32.gmra.mrb[0].mxu0 %v785
        %v1295 = vpop.f32.mrb[0].mxu0
        %v1296 = vadd.f32 0.0, %v1295
        %v1297 = vpop.f32.mrb[0].mxu0
        %1298 = vdwg.mxu0
        %v1300 = vsel %vm787, %v781, 0
        %1302 = vmatprep.subr.mxu0 0.0
        %1303 = vmatpush1.msra.mxu0 %v1300
        %1304 = vmatprep.subr.mxu0 0.0
        %1305 = vmatpush1.msra.mxu0 0.0
        %1306 = vmatprep.subr.mxu0 0.0
        %1307 = vmatpush1.msra.mxu0 0.0
        %1308 = vmatprep.subr.mxu0 0.0
        %1309 = vmatpush1.msra.mxu0 0.0
        %1310 = vmatprep.subr.mxu0 0.0
        %1311 = vmatpush1.msra.mxu0 0.0
        %1312 = vmatprep.subr.mxu0 0.0
        %1313 = vmatpush1.msra.mxu0 0.0
        %1314 = vmatprep.subr.mxu0 0.0
        %1315 = vmatpush1.msra.mxu0 0.0
        %1316 = vmatprep.subr.mxu0 0.0
        %1317 = vmatpush1.msra.mxu0 0.0
        %1318 = vmatprep.subr.mxu0 0.0
        %1319 = vmatpush1.msra.mxu0 0.0
        %1320 = vmatprep.subr.mxu0 0.0
        %1321 = vmatpush1.msra.mxu0 0.0
        %1322 = vmatprep.subr.mxu0 0.0
        %1323 = vmatpush1.msra.mxu0 0.0
        %1324 = vmatprep.subr.mxu0 0.0
        %1325 = vmatpush1.msra.mxu0 0.0
        %1326 = vmatprep.subr.mxu0 0.0
        %1327 = vmatpush1.msra.mxu0 0.0
        %1328 = vmatprep.subr.mxu0 0.0
        %1329 = vmatpush1.msra.mxu0 0.0
        %1330 = vmatprep.subr.mxu0 0.0
        %1331 = vmatpush1.msra.mxu0 0.0
        %1332 = vmatprep.subr.mxu0 0.0
        %1333 = vmatpush1.msra.mxu0 0.0
        %1334 = vmatprep.subr.mxu0 0.0
        %1335 = vmatpush1.msra.mxu0 0.0
        %1336 = vmatprep.subr.mxu0 0.0
        %1337 = vmatpush1.msra.mxu0 0.0
        %1338 = vmatprep.subr.mxu0 0.0
        %1339 = vmatpush1.msra.mxu0 0.0
        %1340 = vmatprep.subr.mxu0 0.0
        %1341 = vmatpush1.msra.mxu0 0.0
        %1342 = vmatprep.subr.mxu0 0.0
        %1343 = vmatpush1.msra.mxu0 0.0
        %1344 = vmatprep.subr.mxu0 0.0
        %1345 = vmatpush1.msra.mxu0 0.0
        %1346 = vmatprep.subr.mxu0 0.0
        %1347 = vmatpush1.msra.mxu0 0.0
        %1348 = vmatprep.subr.mxu0 0.0
        %1349 = vmatpush1.msra.mxu0 0.0
        %1350 = vmatprep.subr.mxu0 0.0
        %1351 = vmatpush1.msra.mxu0 0.0
        %1352 = vmatprep.subr.mxu0 0.0
        %1353 = vmatpush1.msra.mxu0 0.0
        %1354 = vmatprep.subr.mxu0 0.0
        %1355 = vmatpush1.msra.mxu0 0.0
        %1356 = vmatprep.subr.mxu0 0.0
        %1357 = vmatpush1.msra.mxu0 0.0
        %1358 = vmatprep.subr.mxu0 0.0
        %1359 = vmatpush1.msra.mxu0 0.0
        %1360 = vmatprep.subr.mxu0 0.0
        %1361 = vmatpush1.msra.mxu0 0.0
        %1362 = vmatprep.subr.mxu0 0.0
        %1363 = vmatpush1.msra.mxu0 0.0
        %1364 = vmatprep.subr.mxu0 0.0
        %1365 = vmatpush1.msra.mxu0 0.0
        %1366 = vmatprep.mubr.f32.mxu0 0.0
        %1367 = vmatmul.mubr.f32.gmra.mrb[0].mxu0 %v785
        %v1368 = vpop.f32.mrb[0].mxu0
        %v1369 = vadd.f32 0.0, %v1368
        %v1370 = vpop.f32.mrb[0].mxu0
        %1371 = vdwg.mxu0
        %v1372 = vand.u32 2147483647, %v858
        %vm1373 = vcmp.le.f32.partialorder %v1372, 0.7853982
        %vm1374 = vcmp.lt.s32.totalorder %v858, 0
        %v1375 = vand.u32 %v858, 2139095040
        %v1376 = vshrl.u32 %v1375, 23
        %v1377 = vsub.s32 %v1376, 127
        %v1378 = vand.u32 2147483647, %v858
        %v1379 = vand.u32 %v1378, 8388607
        %v1380 = vor.u32 %v1379, 8388608
        %v1381 = vsub.s32 0, %v1380
        %v1382 = vadd.s32 %v1377, 1
        %vm1383 = vcmp.gt.s32.totalorder %v1382, 0
        %v1384 = vsel %vm1383, %v1382, 0
        %v1385 = vshrl.u32 %v1384, 5
        %v1386 = vand.u32 %v1384, 31
        %v1387 = vsub.s32 32, %v1386
        %v1388 = vshrl.u32 683565275, %v1387
        %v1389 = vshll.u32 683565275, %v1386
        %v1390 = vshrl.u32 2475754826, %v1387
        %v1391 = vor.u32 %v1389, %v1390
        %v1392 = vshll.u32 2475754826, %v1386
        %v1393 = vshrl.u32 2131351028, %v1387
        %v1394 = vor.u32 %v1392, %v1393
        %v1395 = vshll.u32 2131351028, %v1386
        %v1396 = vshrl.u32 2102212464, %v1387
        %v1397 = vor.u32 %v1395, %v1396
        %v1398 = vshll.u32 2102212464, %v1386
        %v1399 = vshrl.u32 920167782, %v1387
        %v1400 = vor.u32 %v1398, %v1399
        %v1401 = vshll.u32 920167782, %v1386
        %v1402 = vshrl.u32 1326507024, %v1387
        %v1403 = vor.u32 %v1401, %v1402
        %vm1404 = vcmp.lt.s32.totalorder %v1385, 1
        %vm1405 = vcmp.lt.s32.totalorder %v1385, 2
        %vm1406 = vcmp.lt.s32.totalorder %v1385, 3
        %vm1407 = vcmp.lt.s32.totalorder %v1385, 4
        %v1408 = vsel %vm1404, %v1388, %v1391
        %v1409 = vsel %vm1407, %v1397, 2102212464
        %v1410 = vsel %vm1406, %v1394, %v1409
        %v1411 = vsel %vm1405, %v1408, %v1410
        %v1412 = vsel %vm1404, %v1391, %v1394
        %v1413 = vsel %vm1407, %v1400, 920167782
        %v1414 = vsel %vm1406, %v1397, %v1413
        %v1415 = vsel %vm1405, %v1412, %v1414
        %v1416 = vsel %vm1404, %v1394, %v1397
        %v1417 = vsel %vm1407, %v1403, 1326507024
        %v1418 = vsel %vm1406, %v1400, %v1417
        %v1419 = vsel %vm1405, %v1416, %v1418
        %v1420 = vshll.u32 %v1380, 8
        %v1421 = vmul.u32.u64.compose %v1420, %v1419
        %v1422 = vextract.low.u32 %v1421
        %v1423 = vextract.high.u32 %v1421
        %v1424 = vmul.u32.u64.compose %v1420, %v1415
        %v1425 = vextract.low.u32 %v1424
        %v1426 = vextract.high.u32 %v1424
        %v1427 = vmul.u32 %v1420, %v1411
        %v1428 = vadd.s32 %v1423, %v1425
        %vm1429 = vc.u32 %v1423, %v1425
        %v1430 = vadd.s32 %v1426, 1
        %v1431 = vsel %vm1429, %v1430, %v1426
        %v1432 = vadd.s32 %v1427, %v1431
        %v1433 = vadd.s32 %v1432, 536870912
        %v1434 = vshrl.u32 %v1433, 30
        %v1435 = vshll.u32 %v1434, 30
        %v1436 = vsub.s32 %v1432, %v1435
        %vm1437 = vcmp.lt.s32.totalorder %v1436, 0
        %v1438 = vsub.s32 0, %v1436
        %v1439 = vsel %vm1437, %v1438, %v1436
        %v1440 = vclz %v1439
        %v1441 = vsub.s32 %v1440, 2
        %vm1442 = vcmp.gt.s32.totalorder 0, %v1441
        %v1443 = vsel %vm1442, 0, %v1441
        %v1444 = vsub.s32 32, %v1443
        %v1445 = vshll.u32 %v1436, %v1443
        %v1446 = vshrl.u32 %v1428, %v1444
        %v1447 = vor.u32 %v1445, %v1446
        %v1448 = vsub.s32 4294967266, %v1443
        %v1449 = vadd.s32 %v1448, 127
        %v1450 = vshll.u32 %v1449, 23
        %v1451 = vor.u32 4788187, %v1450
        %v1452 = vand.u32 2147483647, %v1451
        %v1454 = vcvt.s32.f32 %v1447
        %v1455 = vmul.f32 %v1454, %v1452
        %v1456 = vxor.u32 %v1455, 2147483648
        %v1457 = vsel %vm1374, %v1456, %v1455
        %v1458 = vsub.s32 4, %v1434
        %v1459 = vsel %vm1374, %v1458, %v1434
        %v1460 = vsel %vm1373, %v858, %v1457
        %v1461 = vsel %vm1373, 0, %v1459
        %v1462 = vcosq.f32.pop %v1460
        %v1463 = vsinq.f32.pop %v1460
        %vm1464 = vweird.f32 %v858
        %v1465 = vadd.s32 %v1461, 3
        %v1466 = vand.u32 %v1465, 3
        %vm1467 = vcmp.lt.s32.totalorder %v1466, 2
        %vm1468 = vcmp.eq.s32.totalorder %v1466, 0
        %v1469 = vxor.u32 %v1463, 2147483648
        %v1470 = vsel %vm1468, %v1462, %v1469
        %vm1471 = vcmp.eq.s32.totalorder %v1466, 2
        %v1472 = vxor.u32 %v1462, 2147483648
        %v1473 = vsel %vm1471, %v1472, %v1463
        %v1474 = vsel %vm1467, %v1470, %v1473
        %v1475 = vsel %vm1464, nan, %v1474
        %v1476 = vand.u32 2147483647, %v931
        %vm1477 = vcmp.le.f32.partialorder %v1476, 0.7853982
        %vm1478 = vcmp.lt.s32.totalorder %v931, 0
        %v1479 = vand.u32 %v931, 2139095040
        %v1480 = vshrl.u32 %v1479, 23
        %v1481 = vsub.s32 %v1480, 127
        %v1482 = vand.u32 2147483647, %v931
        %v1483 = vand.u32 %v1482, 8388607
        %v1484 = vor.u32 %v1483, 8388608
        %v1485 = vsub.s32 0, %v1484
        %v1486 = vadd.s32 %v1481, 1
        %vm1487 = vcmp.gt.s32.totalorder %v1486, 0
        %v1488 = vsel %vm1487, %v1486, 0
        %v1489 = vshrl.u32 %v1488, 5
        %v1490 = vand.u32 %v1488, 31
        %v1491 = vsub.s32 32, %v1490
        %v1492 = vshrl.u32 683565275, %v1491
        %v1493 = vshll.u32 683565275, %v1490
        %v1494 = vshrl.u32 2475754826, %v1491
        %v1495 = vor.u32 %v1493, %v1494
        %v1496 = vshll.u32 2475754826, %v1490
        %v1497 = vshrl.u32 2131351028, %v1491
        %v1498 = vor.u32 %v1496, %v1497
        %v1499 = vshll.u32 2131351028, %v1490
        %v1500 = vshrl.u32 2102212464, %v1491
        %v1501 = vor.u32 %v1499, %v1500
        %v1502 = vshll.u32 2102212464, %v1490
        %v1503 = vshrl.u32 920167782, %v1491
        %v1504 = vor.u32 %v1502, %v1503
        %v1505 = vshll.u32 920167782, %v1490
        %v1506 = vshrl.u32 1326507024, %v1491
        %v1507 = vor.u32 %v1505, %v1506
        %vm1508 = vcmp.lt.s32.totalorder %v1489, 1
        %vm1509 = vcmp.lt.s32.totalorder %v1489, 2
        %vm1510 = vcmp.lt.s32.totalorder %v1489, 3
        %vm1511 = vcmp.lt.s32.totalorder %v1489, 4
        %v1512 = vsel %vm1508, %v1492, %v1495
        %v1513 = vsel %vm1511, %v1501, 2102212464
        %v1514 = vsel %vm1510, %v1498, %v1513
        %v1515 = vsel %vm1509, %v1512, %v1514
        %v1516 = vsel %vm1508, %v1495, %v1498
        %v1517 = vsel %vm1511, %v1504, 920167782
        %v1518 = vsel %vm1510, %v1501, %v1517
        %v1519 = vsel %vm1509, %v1516, %v1518
        %v1520 = vsel %vm1508, %v1498, %v1501
        %v1521 = vsel %vm1511, %v1507, 1326507024
        %v1522 = vsel %vm1510, %v1504, %v1521
        %v1523 = vsel %vm1509, %v1520, %v1522
        %v1524 = vshll.u32 %v1484, 8
        %v1525 = vmul.u32.u64.compose %v1524, %v1523
        %v1526 = vextract.low.u32 %v1525
        %v1527 = vextract.high.u32 %v1525
        %v1528 = vmul.u32.u64.compose %v1524, %v1519
        %v1529 = vextract.low.u32 %v1528
        %v1530 = vextract.high.u32 %v1528
        %v1531 = vmul.u32 %v1524, %v1515
        %v1532 = vadd.s32 %v1527, %v1529
        %vm1533 = vc.u32 %v1527, %v1529
        %v1534 = vadd.s32 %v1530, 1
        %v1535 = vsel %vm1533, %v1534, %v1530
        %v1536 = vadd.s32 %v1531, %v1535
        %v1537 = vadd.s32 %v1536, 536870912
        %v1538 = vshrl.u32 %v1537, 30
        %v1539 = vshll.u32 %v1538, 30
        %v1540 = vsub.s32 %v1536, %v1539
        %vm1541 = vcmp.lt.s32.totalorder %v1540, 0
        %v1542 = vsub.s32 0, %v1540
        %v1543 = vsel %vm1541, %v1542, %v1540
        %v1544 = vclz %v1543
        %v1545 = vsub.s32 %v1544, 2
        %vm1546 = vcmp.gt.s32.totalorder 0, %v1545
        %v1547 = vsel %vm1546, 0, %v1545
        %v1548 = vsub.s32 32, %v1547
        %v1549 = vshll.u32 %v1540, %v1547
        %v1550 = vshrl.u32 %v1532, %v1548
        %v1551 = vor.u32 %v1549, %v1550
        %v1552 = vsub.s32 4294967266, %v1547
        %v1553 = vadd.s32 %v1552, 127
        %v1554 = vshll.u32 %v1553, 23
        %v1555 = vor.u32 4788187, %v1554
        %v1556 = vand.u32 2147483647, %v1555
        %v1558 = vcvt.s32.f32 %v1551
        %v1559 = vmul.f32 %v1558, %v1556
        %v1560 = vxor.u32 %v1559, 2147483648
        %v1561 = vsel %vm1478, %v1560, %v1559
        %v1562 = vsub.s32 4, %v1538
        %v1563 = vsel %vm1478, %v1562, %v1538
        %v1564 = vsel %vm1477, %v931, %v1561
        %v1565 = vsel %vm1477, 0, %v1563
        %v1566 = vcosq.f32.pop %v1564
        %v1567 = vsinq.f32.pop %v1564
        %vm1568 = vweird.f32 %v931
        %v1569 = vadd.s32 %v1565, 3
        %v1570 = vand.u32 %v1569, 3
        %vm1571 = vcmp.lt.s32.totalorder %v1570, 2
        %vm1572 = vcmp.eq.s32.totalorder %v1570, 0
        %v1573 = vxor.u32 %v1567, 2147483648
        %v1574 = vsel %vm1572, %v1566, %v1573
        %vm1575 = vcmp.eq.s32.totalorder %v1570, 2
        %v1576 = vxor.u32 %v1566, 2147483648
        %v1577 = vsel %vm1575, %v1576, %v1567
        %v1578 = vsel %vm1571, %v1574, %v1577
        %v1579 = vsel %vm1568, nan, %v1578
        %v1580 = vand.u32 2147483647, %v1004
        %vm1581 = vcmp.le.f32.partialorder %v1580, 0.7853982
        %vm1582 = vcmp.lt.s32.totalorder %v1004, 0
        %v1583 = vand.u32 %v1004, 2139095040
        %v1584 = vshrl.u32 %v1583, 23
        %v1585 = vsub.s32 %v1584, 127
        %v1586 = vand.u32 2147483647, %v1004
        %v1587 = vand.u32 %v1586, 8388607
        %v1588 = vor.u32 %v1587, 8388608
        %v1589 = vsub.s32 0, %v1588
        %v1590 = vadd.s32 %v1585, 1
        %vm1591 = vcmp.gt.s32.totalorder %v1590, 0
        %v1592 = vsel %vm1591, %v1590, 0
        %v1593 = vshrl.u32 %v1592, 5
        %v1594 = vand.u32 %v1592, 31
        %v1595 = vsub.s32 32, %v1594
        %v1596 = vshrl.u32 683565275, %v1595
        %v1597 = vshll.u32 683565275, %v1594
        %v1598 = vshrl.u32 2475754826, %v1595
        %v1599 = vor.u32 %v1597, %v1598
        %v1600 = vshll.u32 2475754826, %v1594
        %v1601 = vshrl.u32 2131351028, %v1595
        %v1602 = vor.u32 %v1600, %v1601
        %v1603 = vshll.u32 2131351028, %v1594
        %v1604 = vshrl.u32 2102212464, %v1595
        %v1605 = vor.u32 %v1603, %v1604
        %v1606 = vshll.u32 2102212464, %v1594
        %v1607 = vshrl.u32 920167782, %v1595
        %v1608 = vor.u32 %v1606, %v1607
        %v1609 = vshll.u32 920167782, %v1594
        %v1610 = vshrl.u32 1326507024, %v1595
        %v1611 = vor.u32 %v1609, %v1610
        %vm1612 = vcmp.lt.s32.totalorder %v1593, 1
        %vm1613 = vcmp.lt.s32.totalorder %v1593, 2
        %vm1614 = vcmp.lt.s32.totalorder %v1593, 3
        %vm1615 = vcmp.lt.s32.totalorder %v1593, 4
        %v1616 = vsel %vm1612, %v1596, %v1599
        %v1617 = vsel %vm1615, %v1605, 2102212464
        %v1618 = vsel %vm1614, %v1602, %v1617
        %v1619 = vsel %vm1613, %v1616, %v1618
        %v1620 = vsel %vm1612, %v1599, %v1602
        %v1621 = vsel %vm1615, %v1608, 920167782
        %v1622 = vsel %vm1614, %v1605, %v1621
        %v1623 = vsel %vm1613, %v1620, %v1622
        %v1624 = vsel %vm1612, %v1602, %v1605
        %v1625 = vsel %vm1615, %v1611, 1326507024
        %v1626 = vsel %vm1614, %v1608, %v1625
        %v1627 = vsel %vm1613, %v1624, %v1626
        %v1628 = vshll.u32 %v1588, 8
        %v1629 = vmul.u32.u64.compose %v1628, %v1627
        %v1630 = vextract.low.u32 %v1629
        %v1631 = vextract.high.u32 %v1629
        %v1632 = vmul.u32.u64.compose %v1628, %v1623
        %v1633 = vextract.low.u32 %v1632
        %v1634 = vextract.high.u32 %v1632
        %v1635 = vmul.u32 %v1628, %v1619
        %v1636 = vadd.s32 %v1631, %v1633
        %vm1637 = vc.u32 %v1631, %v1633
        %v1638 = vadd.s32 %v1634, 1
        %v1639 = vsel %vm1637, %v1638, %v1634
        %v1640 = vadd.s32 %v1635, %v1639
        %v1641 = vadd.s32 %v1640, 536870912
        %v1642 = vshrl.u32 %v1641, 30
        %v1643 = vshll.u32 %v1642, 30
        %v1644 = vsub.s32 %v1640, %v1643
        %vm1645 = vcmp.lt.s32.totalorder %v1644, 0
        %v1646 = vsub.s32 0, %v1644
        %v1647 = vsel %vm1645, %v1646, %v1644
        %v1648 = vclz %v1647
        %v1649 = vsub.s32 %v1648, 2
        %vm1650 = vcmp.gt.s32.totalorder 0, %v1649
        %v1651 = vsel %vm1650, 0, %v1649
        %v1652 = vsub.s32 32, %v1651
        %v1653 = vshll.u32 %v1644, %v1651
        %v1654 = vshrl.u32 %v1636, %v1652
        %v1655 = vor.u32 %v1653, %v1654
        %v1656 = vsub.s32 4294967266, %v1651
        %v1657 = vadd.s32 %v1656, 127
        %v1658 = vshll.u32 %v1657, 23
        %v1659 = vor.u32 4788187, %v1658
        %v1660 = vand.u32 2147483647, %v1659
        %v1662 = vcvt.s32.f32 %v1655
        %v1663 = vmul.f32 %v1662, %v1660
        %v1664 = vxor.u32 %v1663, 2147483648
        %v1665 = vsel %vm1582, %v1664, %v1663
        %v1666 = vsub.s32 4, %v1642
        %v1667 = vsel %vm1582, %v1666, %v1642
        %v1668 = vsel %vm1581, %v1004, %v1665
        %v1669 = vsel %vm1581, 0, %v1667
        %v1670 = vcosq.f32.pop %v1668
        %v1671 = vsinq.f32.pop %v1668
        %vm1672 = vweird.f32 %v1004
        %v1673 = vadd.s32 %v1669, 3
        %v1674 = vand.u32 %v1673, 3
        %vm1675 = vcmp.lt.s32.totalorder %v1674, 2
        %vm1676 = vcmp.eq.s32.totalorder %v1674, 0
        %v1677 = vxor.u32 %v1671, 2147483648
        %v1678 = vsel %vm1676, %v1670, %v1677
        %vm1679 = vcmp.eq.s32.totalorder %v1674, 2
        %v1680 = vxor.u32 %v1670, 2147483648
        %v1681 = vsel %vm1679, %v1680, %v1671
        %v1682 = vsel %vm1675, %v1678, %v1681
        %v1683 = vsel %vm1672, nan, %v1682
        %v1684 = vand.u32 2147483647, %v1077
        %vm1685 = vcmp.le.f32.partialorder %v1684, 0.7853982
        %vm1686 = vcmp.lt.s32.totalorder %v1077, 0
        %v1687 = vand.u32 %v1077, 2139095040
        %v1688 = vshrl.u32 %v1687, 23
        %v1689 = vsub.s32 %v1688, 127
        %v1690 = vand.u32 2147483647, %v1077
        %v1691 = vand.u32 %v1690, 8388607
        %v1692 = vor.u32 %v1691, 8388608
        %v1693 = vsub.s32 0, %v1692
        %v1694 = vadd.s32 %v1689, 1
        %vm1695 = vcmp.gt.s32.totalorder %v1694, 0
        %v1696 = vsel %vm1695, %v1694, 0
        %v1697 = vshrl.u32 %v1696, 5
        %v1698 = vand.u32 %v1696, 31
        %v1699 = vsub.s32 32, %v1698
        %v1700 = vshrl.u32 683565275, %v1699
        %v1701 = vshll.u32 683565275, %v1698
        %v1702 = vshrl.u32 2475754826, %v1699
        %v1703 = vor.u32 %v1701, %v1702
        %v1704 = vshll.u32 2475754826, %v1698
        %v1705 = vshrl.u32 2131351028, %v1699
        %v1706 = vor.u32 %v1704, %v1705
        %v1707 = vshll.u32 2131351028, %v1698
        %v1708 = vshrl.u32 2102212464, %v1699
        %v1709 = vor.u32 %v1707, %v1708
        %v1710 = vshll.u32 2102212464, %v1698
        %v1711 = vshrl.u32 920167782, %v1699
        %v1712 = vor.u32 %v1710, %v1711
        %v1713 = vshll.u32 920167782, %v1698
        %v1714 = vshrl.u32 1326507024, %v1699
        %v1715 = vor.u32 %v1713, %v1714
        %vm1716 = vcmp.lt.s32.totalorder %v1697, 1
        %vm1717 = vcmp.lt.s32.totalorder %v1697, 2
        %vm1718 = vcmp.lt.s32.totalorder %v1697, 3
        %vm1719 = vcmp.lt.s32.totalorder %v1697, 4
        %v1720 = vsel %vm1716, %v1700, %v1703
        %v1721 = vsel %vm1719, %v1709, 2102212464
        %v1722 = vsel %vm1718, %v1706, %v1721
        %v1723 = vsel %vm1717, %v1720, %v1722
        %v1724 = vsel %vm1716, %v1703, %v1706
        %v1725 = vsel %vm1719, %v1712, 920167782
        %v1726 = vsel %vm1718, %v1709, %v1725
        %v1727 = vsel %vm1717, %v1724, %v1726
        %v1728 = vsel %vm1716, %v1706, %v1709
        %v1729 = vsel %vm1719, %v1715, 1326507024
        %v1730 = vsel %vm1718, %v1712, %v1729
        %v1731 = vsel %vm1717, %v1728, %v1730
        %v1732 = vshll.u32 %v1692, 8
        %v1733 = vmul.u32.u64.compose %v1732, %v1731
        %v1734 = vextract.low.u32 %v1733
        %v1735 = vextract.high.u32 %v1733
        %v1736 = vmul.u32.u64.compose %v1732, %v1727
        %v1737 = vextract.low.u32 %v1736
        %v1738 = vextract.high.u32 %v1736
        %v1739 = vmul.u32 %v1732, %v1723
        %v1740 = vadd.s32 %v1735, %v1737
        %vm1741 = vc.u32 %v1735, %v1737
        %v1742 = vadd.s32 %v1738, 1
        %v1743 = vsel %vm1741, %v1742, %v1738
        %v1744 = vadd.s32 %v1739, %v1743
        %v1745 = vadd.s32 %v1744, 536870912
        %v1746 = vshrl.u32 %v1745, 30
        %v1747 = vshll.u32 %v1746, 30
        %v1748 = vsub.s32 %v1744, %v1747
        %vm1749 = vcmp.lt.s32.totalorder %v1748, 0
        %v1750 = vsub.s32 0, %v1748
        %v1751 = vsel %vm1749, %v1750, %v1748
        %v1752 = vclz %v1751
        %v1753 = vsub.s32 %v1752, 2
        %vm1754 = vcmp.gt.s32.totalorder 0, %v1753
        %v1755 = vsel %vm1754, 0, %v1753
        %v1756 = vsub.s32 32, %v1755
        %v1757 = vshll.u32 %v1748, %v1755
        %v1758 = vshrl.u32 %v1740, %v1756
        %v1759 = vor.u32 %v1757, %v1758
        %v1760 = vsub.s32 4294967266, %v1755
        %v1761 = vadd.s32 %v1760, 127
        %v1762 = vshll.u32 %v1761, 23
        %v1763 = vor.u32 4788187, %v1762
        %v1764 = vand.u32 2147483647, %v1763
        %v1766 = vcvt.s32.f32 %v1759
        %v1767 = vmul.f32 %v1766, %v1764
        %v1768 = vxor.u32 %v1767, 2147483648
        %v1769 = vsel %vm1686, %v1768, %v1767
        %v1770 = vsub.s32 4, %v1746
        %v1771 = vsel %vm1686, %v1770, %v1746
        %v1772 = vsel %vm1685, %v1077, %v1769
        %v1773 = vsel %vm1685, 0, %v1771
        %v1774 = vcosq.f32.pop %v1772
        %v1775 = vsinq.f32.pop %v1772
        %vm1776 = vweird.f32 %v1077
        %v1777 = vadd.s32 %v1773, 3
        %v1778 = vand.u32 %v1777, 3
        %vm1779 = vcmp.lt.s32.totalorder %v1778, 2
        %vm1780 = vcmp.eq.s32.totalorder %v1778, 0
        %v1781 = vxor.u32 %v1775, 2147483648
        %v1782 = vsel %vm1780, %v1774, %v1781
        %vm1783 = vcmp.eq.s32.totalorder %v1778, 2
        %v1784 = vxor.u32 %v1774, 2147483648
        %v1785 = vsel %vm1783, %v1784, %v1775
        %v1786 = vsel %vm1779, %v1782, %v1785
        %v1787 = vsel %vm1776, nan, %v1786
        %v1788 = vand.u32 2147483647, %v1150
        %vm1789 = vcmp.le.f32.partialorder %v1788, 0.7853982
        %vm1790 = vcmp.lt.s32.totalorder %v1150, 0
        %v1791 = vand.u32 %v1150, 2139095040
        %v1792 = vshrl.u32 %v1791, 23
        %v1793 = vsub.s32 %v1792, 127
        %v1794 = vand.u32 2147483647, %v1150
        %v1795 = vand.u32 %v1794, 8388607
        %v1796 = vor.u32 %v1795, 8388608
        %v1797 = vsub.s32 0, %v1796
        %v1798 = vadd.s32 %v1793, 1
        %vm1799 = vcmp.gt.s32.totalorder %v1798, 0
        %v1800 = vsel %vm1799, %v1798, 0
        %v1801 = vshrl.u32 %v1800, 5
        %v1802 = vand.u32 %v1800, 31
        %v1803 = vsub.s32 32, %v1802
        %v1804 = vshrl.u32 683565275, %v1803
        %v1805 = vshll.u32 683565275, %v1802
        %v1806 = vshrl.u32 2475754826, %v1803
        %v1807 = vor.u32 %v1805, %v1806
        %v1808 = vshll.u32 2475754826, %v1802
        %v1809 = vshrl.u32 2131351028, %v1803
        %v1810 = vor.u32 %v1808, %v1809
        %v1811 = vshll.u32 2131351028, %v1802
        %v1812 = vshrl.u32 2102212464, %v1803
        %v1813 = vor.u32 %v1811, %v1812
        %v1814 = vshll.u32 2102212464, %v1802
        %v1815 = vshrl.u32 920167782, %v1803
        %v1816 = vor.u32 %v1814, %v1815
        %v1817 = vshll.u32 920167782, %v1802
        %v1818 = vshrl.u32 1326507024, %v1803
        %v1819 = vor.u32 %v1817, %v1818
        %vm1820 = vcmp.lt.s32.totalorder %v1801, 1
        %vm1821 = vcmp.lt.s32.totalorder %v1801, 2
        %vm1822 = vcmp.lt.s32.totalorder %v1801, 3
        %vm1823 = vcmp.lt.s32.totalorder %v1801, 4
        %v1824 = vsel %vm1820, %v1804, %v1807
        %v1825 = vsel %vm1823, %v1813, 2102212464
        %v1826 = vsel %vm1822, %v1810, %v1825
        %v1827 = vsel %vm1821, %v1824, %v1826
        %v1828 = vsel %vm1820, %v1807, %v1810
        %v1829 = vsel %vm1823, %v1816, 920167782
        %v1830 = vsel %vm1822, %v1813, %v1829
        %v1831 = vsel %vm1821, %v1828, %v1830
        %v1832 = vsel %vm1820, %v1810, %v1813
        %v1833 = vsel %vm1823, %v1819, 1326507024
        %v1834 = vsel %vm1822, %v1816, %v1833
        %v1835 = vsel %vm1821, %v1832, %v1834
        %v1836 = vshll.u32 %v1796, 8
        %v1837 = vmul.u32.u64.compose %v1836, %v1835
        %v1838 = vextract.low.u32 %v1837
        %v1839 = vextract.high.u32 %v1837
        %v1840 = vmul.u32.u64.compose %v1836, %v1831
        %v1841 = vextract.low.u32 %v1840
        %v1842 = vextract.high.u32 %v1840
        %v1843 = vmul.u32 %v1836, %v1827
        %v1844 = vadd.s32 %v1839, %v1841
        %vm1845 = vc.u32 %v1839, %v1841
        %v1846 = vadd.s32 %v1842, 1
        %v1847 = vsel %vm1845, %v1846, %v1842
        %v1848 = vadd.s32 %v1843, %v1847
        %v1849 = vadd.s32 %v1848, 536870912
        %v1850 = vshrl.u32 %v1849, 30
        %v1851 = vshll.u32 %v1850, 30
        %v1852 = vsub.s32 %v1848, %v1851
        %vm1853 = vcmp.lt.s32.totalorder %v1852, 0
        %v1854 = vsub.s32 0, %v1852
        %v1855 = vsel %vm1853, %v1854, %v1852
        %v1856 = vclz %v1855
        %v1857 = vsub.s32 %v1856, 2
        %vm1858 = vcmp.gt.s32.totalorder 0, %v1857
        %v1859 = vsel %vm1858, 0, %v1857
        %v1860 = vsub.s32 32, %v1859
        %v1861 = vshll.u32 %v1852, %v1859
        %v1862 = vshrl.u32 %v1844, %v1860
        %v1863 = vor.u32 %v1861, %v1862
        %v1864 = vsub.s32 4294967266, %v1859
        %v1865 = vadd.s32 %v1864, 127
        %v1866 = vshll.u32 %v1865, 23
        %v1867 = vor.u32 4788187, %v1866
        %v1868 = vand.u32 2147483647, %v1867
        %v1870 = vcvt.s32.f32 %v1863
        %v1871 = vmul.f32 %v1870, %v1868
        %v1872 = vxor.u32 %v1871, 2147483648
        %v1873 = vsel %vm1790, %v1872, %v1871
        %v1874 = vsub.s32 4, %v1850
        %v1875 = vsel %vm1790, %v1874, %v1850
        %v1876 = vsel %vm1789, %v1150, %v1873
        %v1877 = vsel %vm1789, 0, %v1875
        %v1878 = vcosq.f32.pop %v1876
        %v1879 = vsinq.f32.pop %v1876
        %vm1880 = vweird.f32 %v1150
        %v1881 = vadd.s32 %v1877, 3
        %v1882 = vand.u32 %v1881, 3
        %vm1883 = vcmp.lt.s32.totalorder %v1882, 2
        %vm1884 = vcmp.eq.s32.totalorder %v1882, 0
        %v1885 = vxor.u32 %v1879, 2147483648
        %v1886 = vsel %vm1884, %v1878, %v1885
        %vm1887 = vcmp.eq.s32.totalorder %v1882, 2
        %v1888 = vxor.u32 %v1878, 2147483648
        %v1889 = vsel %vm1887, %v1888, %v1879
        %v1890 = vsel %vm1883, %v1886, %v1889
        %v1891 = vsel %vm1880, nan, %v1890
        %v1892 = vand.u32 2147483647, %v1223
        %vm1893 = vcmp.le.f32.partialorder %v1892, 0.7853982
        %vm1894 = vcmp.lt.s32.totalorder %v1223, 0
        %v1895 = vand.u32 %v1223, 2139095040
        %v1896 = vshrl.u32 %v1895, 23
        %v1897 = vsub.s32 %v1896, 127
        %v1898 = vand.u32 2147483647, %v1223
        %v1899 = vand.u32 %v1898, 8388607
        %v1900 = vor.u32 %v1899, 8388608
        %v1901 = vsub.s32 0, %v1900
        %v1902 = vadd.s32 %v1897, 1
        %vm1903 = vcmp.gt.s32.totalorder %v1902, 0
        %v1904 = vsel %vm1903, %v1902, 0
        %v1905 = vshrl.u32 %v1904, 5
        %v1906 = vand.u32 %v1904, 31
        %v1907 = vsub.s32 32, %v1906
        %v1908 = vshrl.u32 683565275, %v1907
        %v1909 = vshll.u32 683565275, %v1906
        %v1910 = vshrl.u32 2475754826, %v1907
        %v1911 = vor.u32 %v1909, %v1910
        %v1912 = vshll.u32 2475754826, %v1906
        %v1913 = vshrl.u32 2131351028, %v1907
        %v1914 = vor.u32 %v1912, %v1913
        %v1915 = vshll.u32 2131351028, %v1906
        %v1916 = vshrl.u32 2102212464, %v1907
        %v1917 = vor.u32 %v1915, %v1916
        %v1918 = vshll.u32 2102212464, %v1906
        %v1919 = vshrl.u32 920167782, %v1907
        %v1920 = vor.u32 %v1918, %v1919
        %v1921 = vshll.u32 920167782, %v1906
        %v1922 = vshrl.u32 1326507024, %v1907
        %v1923 = vor.u32 %v1921, %v1922
        %vm1924 = vcmp.lt.s32.totalorder %v1905, 1
        %vm1925 = vcmp.lt.s32.totalorder %v1905, 2
        %vm1926 = vcmp.lt.s32.totalorder %v1905, 3
        %vm1927 = vcmp.lt.s32.totalorder %v1905, 4
        %v1928 = vsel %vm1924, %v1908, %v1911
        %v1929 = vsel %vm1927, %v1917, 2102212464
        %v1930 = vsel %vm1926, %v1914, %v1929
        %v1931 = vsel %vm1925, %v1928, %v1930
        %v1932 = vsel %vm1924, %v1911, %v1914
        %v1933 = vsel %vm1927, %v1920, 920167782
        %v1934 = vsel %vm1926, %v1917, %v1933
        %v1935 = vsel %vm1925, %v1932, %v1934
        %v1936 = vsel %vm1924, %v1914, %v1917
        %v1937 = vsel %vm1927, %v1923, 1326507024
        %v1938 = vsel %vm1926, %v1920, %v1937
        %v1939 = vsel %vm1925, %v1936, %v1938
        %v1940 = vshll.u32 %v1900, 8
        %v1941 = vmul.u32.u64.compose %v1940, %v1939
        %v1942 = vextract.low.u32 %v1941
        %v1943 = vextract.high.u32 %v1941
        %v1944 = vmul.u32.u64.compose %v1940, %v1935
        %v1945 = vextract.low.u32 %v1944
        %v1946 = vextract.high.u32 %v1944
        %v1947 = vmul.u32 %v1940, %v1931
        %v1948 = vadd.s32 %v1943, %v1945
        %vm1949 = vc.u32 %v1943, %v1945
        %v1950 = vadd.s32 %v1946, 1
        %v1951 = vsel %vm1949, %v1950, %v1946
        %v1952 = vadd.s32 %v1947, %v1951
        %v1953 = vadd.s32 %v1952, 536870912
        %v1954 = vshrl.u32 %v1953, 30
        %v1955 = vshll.u32 %v1954, 30
        %v1956 = vsub.s32 %v1952, %v1955
        %vm1957 = vcmp.lt.s32.totalorder %v1956, 0
        %v1958 = vsub.s32 0, %v1956
        %v1959 = vsel %vm1957, %v1958, %v1956
        %v1960 = vclz %v1959
        %v1961 = vsub.s32 %v1960, 2
        %vm1962 = vcmp.gt.s32.totalorder 0, %v1961
        %v1963 = vsel %vm1962, 0, %v1961
        %v1964 = vsub.s32 32, %v1963
        %v1965 = vshll.u32 %v1956, %v1963
        %v1966 = vshrl.u32 %v1948, %v1964
        %v1967 = vor.u32 %v1965, %v1966
        %v1968 = vsub.s32 4294967266, %v1963
        %v1969 = vadd.s32 %v1968, 127
        %v1970 = vshll.u32 %v1969, 23
        %v1971 = vor.u32 4788187, %v1970
        %v1972 = vand.u32 2147483647, %v1971
        %v1974 = vcvt.s32.f32 %v1967
        %v1975 = vmul.f32 %v1974, %v1972
        %v1976 = vxor.u32 %v1975, 2147483648
        %v1977 = vsel %vm1894, %v1976, %v1975
        %v1978 = vsub.s32 4, %v1954
        %v1979 = vsel %vm1894, %v1978, %v1954
        %v1980 = vsel %vm1893, %v1223, %v1977
        %v1981 = vsel %vm1893, 0, %v1979
        %v1982 = vcosq.f32.pop %v1980
        %v1983 = vsinq.f32.pop %v1980
        %vm1984 = vweird.f32 %v1223
        %v1985 = vadd.s32 %v1981, 3
        %v1986 = vand.u32 %v1985, 3
        %vm1987 = vcmp.lt.s32.totalorder %v1986, 2
        %vm1988 = vcmp.eq.s32.totalorder %v1986, 0
        %v1989 = vxor.u32 %v1983, 2147483648
        %v1990 = vsel %vm1988, %v1982, %v1989
        %vm1991 = vcmp.eq.s32.totalorder %v1986, 2
        %v1992 = vxor.u32 %v1982, 2147483648
        %v1993 = vsel %vm1991, %v1992, %v1983
        %v1994 = vsel %vm1987, %v1990, %v1993
        %v1995 = vsel %vm1984, nan, %v1994
        %v1996 = vand.u32 2147483647, %v1296
        %vm1997 = vcmp.le.f32.partialorder %v1996, 0.7853982
        %vm1998 = vcmp.lt.s32.totalorder %v1296, 0
        %v1999 = vand.u32 %v1296, 2139095040
        %v2000 = vshrl.u32 %v1999, 23
        %v2001 = vsub.s32 %v2000, 127
        %v2002 = vand.u32 2147483647, %v1296
        %v2003 = vand.u32 %v2002, 8388607
        %v2004 = vor.u32 %v2003, 8388608
        %v2005 = vsub.s32 0, %v2004
        %v2006 = vadd.s32 %v2001, 1
        %vm2007 = vcmp.gt.s32.totalorder %v2006, 0
        %v2008 = vsel %vm2007, %v2006, 0
        %v2009 = vshrl.u32 %v2008, 5
        %v2010 = vand.u32 %v2008, 31
        %v2011 = vsub.s32 32, %v2010
        %v2012 = vshrl.u32 683565275, %v2011
        %v2013 = vshll.u32 683565275, %v2010
        %v2014 = vshrl.u32 2475754826, %v2011
        %v2015 = vor.u32 %v2013, %v2014
        %v2016 = vshll.u32 2475754826, %v2010
        %v2017 = vshrl.u32 2131351028, %v2011
        %v2018 = vor.u32 %v2016, %v2017
        %v2019 = vshll.u32 2131351028, %v2010
        %v2020 = vshrl.u32 2102212464, %v2011
        %v2021 = vor.u32 %v2019, %v2020
        %v2022 = vshll.u32 2102212464, %v2010
        %v2023 = vshrl.u32 920167782, %v2011
        %v2024 = vor.u32 %v2022, %v2023
        %v2025 = vshll.u32 920167782, %v2010
        %v2026 = vshrl.u32 1326507024, %v2011
        %v2027 = vor.u32 %v2025, %v2026
        %vm2028 = vcmp.lt.s32.totalorder %v2009, 1
        %vm2029 = vcmp.lt.s32.totalorder %v2009, 2
        %vm2030 = vcmp.lt.s32.totalorder %v2009, 3
        %vm2031 = vcmp.lt.s32.totalorder %v2009, 4
        %v2032 = vsel %vm2028, %v2012, %v2015
        %v2033 = vsel %vm2031, %v2021, 2102212464
        %v2034 = vsel %vm2030, %v2018, %v2033
        %v2035 = vsel %vm2029, %v2032, %v2034
        %v2036 = vsel %vm2028, %v2015, %v2018
        %v2037 = vsel %vm2031, %v2024, 920167782
        %v2038 = vsel %vm2030, %v2021, %v2037
        %v2039 = vsel %vm2029, %v2036, %v2038
        %v2040 = vsel %vm2028, %v2018, %v2021
        %v2041 = vsel %vm2031, %v2027, 1326507024
        %v2042 = vsel %vm2030, %v2024, %v2041
        %v2043 = vsel %vm2029, %v2040, %v2042
        %v2044 = vshll.u32 %v2004, 8
        %v2045 = vmul.u32.u64.compose %v2044, %v2043
        %v2046 = vextract.low.u32 %v2045
        %v2047 = vextract.high.u32 %v2045
        %v2048 = vmul.u32.u64.compose %v2044, %v2039
        %v2049 = vextract.low.u32 %v2048
        %v2050 = vextract.high.u32 %v2048
        %v2051 = vmul.u32 %v2044, %v2035
        %v2052 = vadd.s32 %v2047, %v2049
        %vm2053 = vc.u32 %v2047, %v2049
        %v2054 = vadd.s32 %v2050, 1
        %v2055 = vsel %vm2053, %v2054, %v2050
        %v2056 = vadd.s32 %v2051, %v2055
        %v2057 = vadd.s32 %v2056, 536870912
        %v2058 = vshrl.u32 %v2057, 30
        %v2059 = vshll.u32 %v2058, 30
        %v2060 = vsub.s32 %v2056, %v2059
        %vm2061 = vcmp.lt.s32.totalorder %v2060, 0
        %v2062 = vsub.s32 0, %v2060
        %v2063 = vsel %vm2061, %v2062, %v2060
        %v2064 = vclz %v2063
        %v2065 = vsub.s32 %v2064, 2
        %vm2066 = vcmp.gt.s32.totalorder 0, %v2065
        %v2067 = vsel %vm2066, 0, %v2065
        %v2068 = vsub.s32 32, %v2067
        %v2069 = vshll.u32 %v2060, %v2067
        %v2070 = vshrl.u32 %v2052, %v2068
        %v2071 = vor.u32 %v2069, %v2070
        %v2072 = vsub.s32 4294967266, %v2067
        %v2073 = vadd.s32 %v2072, 127
        %v2074 = vshll.u32 %v2073, 23
        %v2075 = vor.u32 4788187, %v2074
        %v2076 = vand.u32 2147483647, %v2075
        %v2078 = vcvt.s32.f32 %v2071
        %v2079 = vmul.f32 %v2078, %v2076
        %v2080 = vxor.u32 %v2079, 2147483648
        %v2081 = vsel %vm1998, %v2080, %v2079
        %v2082 = vsub.s32 4, %v2058
        %v2083 = vsel %vm1998, %v2082, %v2058
        %v2084 = vsel %vm1997, %v1296, %v2081
        %v2085 = vsel %vm1997, 0, %v2083
        %v2086 = vcosq.f32.pop %v2084
        %v2087 = vsinq.f32.pop %v2084
        %vm2088 = vweird.f32 %v1296
        %v2089 = vadd.s32 %v2085, 3
        %v2090 = vand.u32 %v2089, 3
        %vm2091 = vcmp.lt.s32.totalorder %v2090, 2
        %vm2092 = vcmp.eq.s32.totalorder %v2090, 0
        %v2093 = vxor.u32 %v2087, 2147483648
        %v2094 = vsel %vm2092, %v2086, %v2093
        %vm2095 = vcmp.eq.s32.totalorder %v2090, 2
        %v2096 = vxor.u32 %v2086, 2147483648
        %v2097 = vsel %vm2095, %v2096, %v2087
        %v2098 = vsel %vm2091, %v2094, %v2097
        %v2099 = vsel %vm2088, nan, %v2098
        %v2100 = vand.u32 2147483647, %v1369
        %vm2101 = vcmp.le.f32.partialorder %v2100, 0.7853982
        %vm2102 = vcmp.lt.s32.totalorder %v1369, 0
        %v2103 = vand.u32 %v1369, 2139095040
        %v2104 = vshrl.u32 %v2103, 23
        %v2105 = vsub.s32 %v2104, 127
        %v2106 = vand.u32 2147483647, %v1369
        %v2107 = vand.u32 %v2106, 8388607
        %v2108 = vor.u32 %v2107, 8388608
        %v2109 = vsub.s32 0, %v2108
        %v2110 = vadd.s32 %v2105, 1
        %vm2111 = vcmp.gt.s32.totalorder %v2110, 0
        %v2112 = vsel %vm2111, %v2110, 0
        %v2113 = vshrl.u32 %v2112, 5
        %v2114 = vand.u32 %v2112, 31
        %v2115 = vsub.s32 32, %v2114
        %v2116 = vshrl.u32 683565275, %v2115
        %v2117 = vshll.u32 683565275, %v2114
        %v2118 = vshrl.u32 2475754826, %v2115
        %v2119 = vor.u32 %v2117, %v2118
        %v2120 = vshll.u32 2475754826, %v2114
        %v2121 = vshrl.u32 2131351028, %v2115
        %v2122 = vor.u32 %v2120, %v2121
        %v2123 = vshll.u32 2131351028, %v2114
        %v2124 = vshrl.u32 2102212464, %v2115
        %v2125 = vor.u32 %v2123, %v2124
        %v2126 = vshll.u32 2102212464, %v2114
        %v2127 = vshrl.u32 920167782, %v2115
        %v2128 = vor.u32 %v2126, %v2127
        %v2129 = vshll.u32 920167782, %v2114
        %v2130 = vshrl.u32 1326507024, %v2115
        %v2131 = vor.u32 %v2129, %v2130
        %vm2132 = vcmp.lt.s32.totalorder %v2113, 1
        %vm2133 = vcmp.lt.s32.totalorder %v2113, 2
        %vm2134 = vcmp.lt.s32.totalorder %v2113, 3
        %vm2135 = vcmp.lt.s32.totalorder %v2113, 4
        %v2136 = vsel %vm2132, %v2116, %v2119
        %v2137 = vsel %vm2135, %v2125, 2102212464
        %v2138 = vsel %vm2134, %v2122, %v2137
        %v2139 = vsel %vm2133, %v2136, %v2138
        %v2140 = vsel %vm2132, %v2119, %v2122
        %v2141 = vsel %vm2135, %v2128, 920167782
        %v2142 = vsel %vm2134, %v2125, %v2141
        %v2143 = vsel %vm2133, %v2140, %v2142
        %v2144 = vsel %vm2132, %v2122, %v2125
        %v2145 = vsel %vm2135, %v2131, 1326507024
        %v2146 = vsel %vm2134, %v2128, %v2145
        %v2147 = vsel %vm2133, %v2144, %v2146
        %v2148 = vshll.u32 %v2108, 8
        %v2149 = vmul.u32.u64.compose %v2148, %v2147
        %v2150 = vextract.low.u32 %v2149
        %v2151 = vextract.high.u32 %v2149
        %v2152 = vmul.u32.u64.compose %v2148, %v2143
        %v2153 = vextract.low.u32 %v2152
        %v2154 = vextract.high.u32 %v2152
        %v2155 = vmul.u32 %v2148, %v2139
        %v2156 = vadd.s32 %v2151, %v2153
        %vm2157 = vc.u32 %v2151, %v2153
        %v2158 = vadd.s32 %v2154, 1
        %v2159 = vsel %vm2157, %v2158, %v2154
        %v2160 = vadd.s32 %v2155, %v2159
        %v2161 = vadd.s32 %v2160, 536870912
        %v2162 = vshrl.u32 %v2161, 30
        %v2163 = vshll.u32 %v2162, 30
        %v2164 = vsub.s32 %v2160, %v2163
        %vm2165 = vcmp.lt.s32.totalorder %v2164, 0
        %v2166 = vsub.s32 0, %v2164
        %v2167 = vsel %vm2165, %v2166, %v2164
        %v2168 = vclz %v2167
        %v2169 = vsub.s32 %v2168, 2
        %vm2170 = vcmp.gt.s32.totalorder 0, %v2169
        %v2171 = vsel %vm2170, 0, %v2169
        %v2172 = vsub.s32 32, %v2171
        %v2173 = vshll.u32 %v2164, %v2171
        %v2174 = vshrl.u32 %v2156, %v2172
        %v2175 = vor.u32 %v2173, %v2174
        %v2176 = vsub.s32 4294967266, %v2171
        %v2177 = vadd.s32 %v2176, 127
        %v2178 = vshll.u32 %v2177, 23
        %v2179 = vor.u32 4788187, %v2178
        %v2180 = vand.u32 2147483647, %v2179
        %v2182 = vcvt.s32.f32 %v2175
        %v2183 = vmul.f32 %v2182, %v2180
        %v2184 = vxor.u32 %v2183, 2147483648
        %v2185 = vsel %vm2102, %v2184, %v2183
        %v2186 = vsub.s32 4, %v2162
        %v2187 = vsel %vm2102, %v2186, %v2162
        %v2188 = vsel %vm2101, %v1369, %v2185
        %v2189 = vsel %vm2101, 0, %v2187
        %v2190 = vcosq.f32.pop %v2188
        %v2191 = vsinq.f32.pop %v2188
        %vm2192 = vweird.f32 %v1369
        %v2193 = vadd.s32 %v2189, 3
        %v2194 = vand.u32 %v2193, 3
        %vm2195 = vcmp.lt.s32.totalorder %v2194, 2
        %vm2196 = vcmp.eq.s32.totalorder %v2194, 0
        %v2197 = vxor.u32 %v2191, 2147483648
        %v2198 = vsel %vm2196, %v2190, %v2197
        %vm2199 = vcmp.eq.s32.totalorder %v2194, 2
        %v2200 = vxor.u32 %v2190, 2147483648
        %v2201 = vsel %vm2199, %v2200, %v2191
        %v2202 = vsel %vm2195, %v2198, %v2201
        %v2203 = vsel %vm2192, nan, %v2202
        %2204 = vst [vmem:[%s172] sm:$0xff] %v1475
        %2205 = vst [vmem:[%s172 + $0x8] sm:$0xff] %v1579
        %2206 = vst [vmem:[%s172 + $0x10] sm:$0xff] %v1683
        %2207 = vst [vmem:[%s172 + $0x18] sm:$0xff] %v1787
        %2208 = vst [vmem:[%s172 + $0x20] sm:$0xff] %v1891
        %2209 = vst [vmem:[%s172 + $0x28] sm:$0xff] %v1995
        %2210 = vst [vmem:[%s172 + $0x30] sm:$0xff] %v2099
        %2211 = vst [vmem:[%s172 + $0x38] sm:$0xff] %v2203
        %s2212 = sand.u32 %s75, 1
        %s2213 = scalar_lea.sflag [#allocation5], %s2212
        %s2214 = sand.u32 %s75, 1
        %s2215 = smul.addr %s2214, 64
        %s2216 = scalar_lea.vmem [#allocation8], %s2215
        // Predicated region
        $region37: #{tpu_custom_call.1} parent=27 // pred_check
          %p2217 = pneg %p85
        $region38: #{tpu_custom_call.1} parent=27 // pred_check_branch
          %2219 = sbr.rel (%p2217) target = $region40
        $region39: #{tpu_custom_call.1} parent=27 // pred_region
          %s2220 = smul.u32 8, %s20
          %s2222 = ssub.s32 1024, 1024
          %2223 = vsyncadd %s2213, %s2222
          %s2224 = smul.addr %s2220, 128
          %s2225 = scalar_lea.hbm %s2, %s2224
          %s2226 = sshll.u32 %s2216, 4
          %s2227 = int_to_ptr.vmem [resolvable:$true] %s2226
          %2232 = dma.vmem_to_hbm [thread:$0]  %s2227, 1024, %s2225, %s2213, 128, 128, 8
        $region40: #{tpu_custom_call.1} parent=27 // pred_fallthru
          _
      $region28: #{tpu_custom_call.1} parent=5 // pred_fallthru
        _
      %p2233 = scmp.le.s32.totalorder 2, %s15
      // Predicated region
      $region41: #{tpu_custom_call.1} parent=5 // pred_check
        %p2234 = pneg %p2233
      $region42: #{tpu_custom_call.1} parent=5 // pred_check_branch
        %2236 = sbr.rel (%p2234) target = $region44
      $region43: #{tpu_custom_call.1} parent=5 // pred_region
        %s2237 = ssub.s32 %s15, 2
        // Predicated region
        $region45: #{tpu_custom_call.1} parent=43 // pred_check
          %p2238 = pneg %p91
        $region46: #{tpu_custom_call.1} parent=43 // pred_check_branch
          %2240 = sbr.rel (%p2238) target = $region48
        $region47: #{tpu_custom_call.1} parent=43 // pred_region
          %s2241 = sand.u32 %s76, 1
          %s2242 = scalar_lea.sflag [#allocation5], %s2241
          %s2243 = sand.u32 %s76, 1
          %s2244 = smul.addr %s2243, 64
          %s2245 = scalar_lea.vmem [#allocation8], %s2244
          %2246 = dma.done %s2242, 1024
        $region48: #{tpu_custom_call.1} parent=43 // pred_fallthru
          _
      $region44: #{tpu_custom_call.1} parent=5 // pred_fallthru
        _
    $region6: #{tpu_custom_call.1} parent=1 // loop_footer
      %s19 = sadd.s32 1, %s15
    $region7: #{tpu_custom_call.1} parent=1 // loop_footer_branch
      %14 = sbr.rel target = $region3
    $region8: #{tpu_custom_call.1} parent=1 // loop_exit
      _
    %2247 = vsyncpa [#allocation4], 1
    %s2248 = scalar_lea.sflag [#allocation4], 1
    %2249 = vsyncpa %s2248, 1
    %2250 = vsyncpa [#allocation7], 1
    %2251 = vsyncpa [#allocation5], 1
    %s2252 = scalar_lea.sflag [#allocation5], 1
    %2253 = vsyncpa %s2252, 1

</llo_original>
